<compile_context>
chip_gen: v5e
topology: v5e:2x2
jax: 0.10.0
libtpu: 0.0.40
codegen_flags: <defaults>
</compile_context>

<pallas_src>
import jax
import jax.numpy as jnp
from jax.experimental import pallas as pl
from jax.experimental.pallas import tpu as pltpu
import numpy as np

# ---------------------------------------------------------------------------
# Model hyper-parameters (small, consistent with the module's __init__)
# ---------------------------------------------------------------------------
BATCH = 2
NUM_ASSETS = 4
SEQ_LEN = 8
LSTM_INPUT = 5          # lstm_input_size
LSTM_HIDDEN = 32        # lstm_hidden_size (scaled down from 128)
GNN_HIDDEN = 16         # gnn_hidden_size (scaled down from 64)
OUTPUT_SIZE = 1
NUM_EDGES = 12

GATE_W = 4 * LSTM_HIDDEN   # 128 = one f32 vreg of packed gates (i|f|g|o)
HEAD_PAD = 128             # padded lane width for GNN / MLP head tensors

VMEM_SPEC = pl.BlockSpec(memory_space=pltpu.MemorySpace.VMEM)


# ---------------------------------------------------------------------------
# Fused kernel: 2-layer LSTM over the sequence + GCN x2 + MLP head.
#
#   x_ref    : [T*N, F+1] bf16  time-major input with a trailing ones column
#   a_ref    : [N, N]     f32   GCN-normalized dense adjacency
#   wih1     : [F+1, 128] bf16  layer-1 input weights, last row = b1
#   whh1     : [H, 128]   bf16  layer-1 recurrent weights (gates packed)
#   w2ih     : [H, 128]   bf16  layer-2 input weights (acts on h1)
#   w2hh     : [H, 128]   bf16  layer-2 recurrent weights (acts on h2)
#   b2       : [1, 128]   f32
#   wg*/bg*  : bf16/f32   padded GCN weights / biases   (128 lanes)
#   wf*/bf*  : bf16/f32   padded MLP-head weights / biases
#   out_ref  : [N, 128]   f32   real output in column 0
# ---------------------------------------------------------------------------
def fused_kernel(x_ref, a_ref,
                 wih1_ref, whh1_ref, w2ih_ref, w2hh_ref, b2_ref,
                 wg1_ref, bg1_ref, wg2_ref, bg2_ref,
                 wf1_ref, bf1_ref, wf2_ref, bf2_ref,
                 out_ref):
    N = a_ref.shape[0]
    T = x_ref.shape[0] // N
    H = whh1_ref.shape[0]            # 32
    G4 = whh1_ref.shape[1]           # 128 = 4*H packed gates

    f32 = jnp.float32
    bf16 = jnp.bfloat16

    # ---- hoisted layer-1 input projection; b1 folded in via the ones column
    xproj = jnp.dot(x_ref[...], wih1_ref[...],
                    preferred_element_type=f32)                 # [T*N, 128]

    whh1 = whh1_ref[...]
    w2ih = w2ih_ref[...]
    w2hh = w2hh_ref[...]
    b2b = jnp.broadcast_to(b2_ref[...], (N, G4))                # broadcast once

    def lstm_cell(gates, c):
        # gates: [N, 128] packed as [i | f | g | o], 32 lanes each.
        # 3 EUP passes per cell; gate separation = static 32-lane slices.
        s = jax.nn.sigmoid(gates)                               # EUP pass 1
        i = s[:, 0 * H:1 * H]
        f = s[:, 1 * H:2 * H]
        o = s[:, 3 * H:4 * H]
        g = jnp.tanh(gates[:, 2 * H:3 * H])                     # EUP pass 2
        c_new = f * c + i * g
        h_new = o * jnp.tanh(c_new)                             # EUP pass 3
        return h_new, c_new

    z0 = jnp.zeros((N, H), f32)
    h1, c1, h2, c2 = z0, z0, z0, z0

    # ---- fully unrolled time loop (T static): 3 small matmuls per step
    for t in range(T):
        g1 = xproj[t * N:(t + 1) * N, :] + jnp.dot(
            h1.astype(bf16), whh1, preferred_element_type=f32)
        h1, c1 = lstm_cell(g1, c1)

        # layer 2: h2 term uses previous-step state (overlaps layer-1 math)
        g2 = (jnp.dot(h2.astype(bf16), w2hh, preferred_element_type=f32)
              + jnp.dot(h1.astype(bf16), w2ih, preferred_element_type=f32)
              + b2b)
        h2, c2 = lstm_cell(g2, c2)

    # ---- GCN layer 1 + ReLU (dropout = identity at inference)
    a = a_ref[...]
    z = jnp.dot(h2.astype(bf16), wg1_ref[...], preferred_element_type=f32)
    z = jnp.dot(a, z, preferred_element_type=f32) + bg1_ref[...]
    z = jnp.maximum(z, 0.0)
    # ---- GCN layer 2 (no activation after the last GNN layer)
    z = jnp.dot(z.astype(bf16), wg2_ref[...], preferred_element_type=f32)
    z = jnp.dot(a, z, preferred_element_type=f32) + bg2_ref[...]
    # ---- fc1 -> ReLU -> fc2  (lane-dense padded output, real value in col 0)
    z = jnp.maximum(
        jnp.dot(z.astype(bf16), wf1_ref[...], preferred_element_type=f32)
        + bf1_ref[...], 0.0)
    out_ref[...] = (jnp.dot(z.astype(bf16), wf2_ref[...],
                            preferred_element_type=f32)
                    + bf2_ref[...])


def lstm_gnn_forward(x, a_norm, kp):
    """x: [B, A, T, F] f32, a_norm: [N, N] f32, kp: packed kernel params."""
    b, a_num, t, f = x.shape
    n = b * a_num
    # time-major flattened input + ones column (folds b1 into wih1): [T*N, F+1]
    x_tnf = jnp.transpose(x.reshape(n, t, f), (1, 0, 2)).reshape(t * n, f)
    x_aug = jnp.concatenate(
        [x_tnf, jnp.ones((t * n, 1), x.dtype)], axis=1).astype(jnp.bfloat16)

    # NOTE: if multiple independent graphs/windows are processed, stack them
    # along the node axis here (raise M toward the MXU width) inside this same
    # single pallas_call rather than adding a grid or more calls.
    out_pad = pl.pallas_call(
        fused_kernel,
        out_shape=jax.ShapeDtypeStruct((n, HEAD_PAD), jnp.float32),
        in_specs=[VMEM_SPEC] * 15,
        out_specs=VMEM_SPEC,
    )(x_aug, a_norm,
      kp["wih1"], kp["whh1"], kp["w2ih"], kp["w2hh"], kp["b2"],
      kp["wg1"], kp["bg1"], kp["wg2"], kp["bg2"],
      kp["wf1"], kp["bf1"], kp["wf2"], kp["bf2"])

    return out_pad[:, :OUTPUT_SIZE].reshape(b, a_num, OUTPUT_SIZE)


# ---------------------------------------------------------------------------
# Glue: build the GCN-normalized dense adjacency (static graph; done once,
# OUTSIDE the per-call jitted forward).
# ---------------------------------------------------------------------------
def build_gcn_adj(edge_index, edge_weight, n):
    src = edge_index[0]
    dst = edge_index[1]
    a = jnp.zeros((n, n), jnp.float32).at[dst, src].add(edge_weight)
    a = a + jnp.eye(n, dtype=jnp.float32)          # self loops, weight 1
    deg = jnp.sum(a, axis=1)
    dinv = 1.0 / jnp.sqrt(deg)
    return a * dinv[:, None] * dinv[None, :]       # D^-1/2 A_hat D^-1/2


# ---------------------------------------------------------------------------
# Parameter packing: canonical (PyTorch-shaped) params -> kernel layout.
# With H=32, the packed gate width 4*H = 128 is already one vreg, so LSTM
# weights keep their natural [*, 4H] layout (no per-gate padding).  Matmul
# weights are cast to bf16; biases stay f32.  GNN / head weights are padded
# to 128 lanes with zeros (zero padding is exact in bf16).
# ---------------------------------------------------------------------------
def pack_kernel_params(p):
    bf16 = jnp.bfloat16

    def pad_cols(w, cols=HEAD_PAD):
        out = jnp.zeros((w.shape[0], cols), jnp.float32)
        return out.at[:, :w.shape[1]].set(w)

    def pad_both(w, rows=HEAD_PAD, cols=HEAD_PAD):
        out = jnp.zeros((rows, cols), jnp.float32)
        return out.at[:w.shape[0], :w.shape[1]].set(w)

    # layer-1 input weights with b1 folded in as an extra input row
    wih1_aug = jnp.concatenate([p["wih1"], p["b1"]], axis=0)   # [F+1, 128]

    return {
        "wih1": wih1_aug.astype(bf16),
        "whh1": p["whh1"].astype(bf16),                        # [32, 128]
        "w2ih": p["wih2"].astype(bf16),                        # [32, 128]
        "w2hh": p["whh2"].astype(bf16),                        # [32, 128]
        "b2": p["b2"],                                         # [1, 128] f32
        "wg1": pad_cols(p["wg1"]).astype(bf16),                # [32, 128]
        "bg1": pad_cols(p["bg1"]),                             # [1, 128] f32
        "wg2": pad_both(p["wg2"]).astype(bf16),                # [128, 128]
        "bg2": pad_cols(p["bg2"]),
        "wf1": pad_both(p["wf1"]).astype(bf16),
        "bf1": pad_cols(p["bf1"]),
        "wf2": pad_both(p["wf2"]).astype(bf16),
        "bf2": pad_cols(p["bf2"]),
    }


# ---------------------------------------------------------------------------
# Pure-JAX f32 reference (same math, unpadded params) for a sanity check.
# ---------------------------------------------------------------------------
def reference_forward(x, edge_index, edge_weight, p):
    b, a_num, t, f = x.shape
    n = b * a_num
    H = LSTM_HIDDEN
    xs = x.reshape(n, t, f)
    h1 = c1 = h2 = c2 = jnp.zeros((n, H), jnp.float32)

    def cell(x_t, h, c, wih, whh, bias):
        g = x_t @ wih + h @ whh + bias
        i = jax.nn.sigmoid(g[:, 0*H:1*H]); fgt = jax.nn.sigmoid(g[:, 1*H:2*H])
        gg = jnp.tanh(g[:, 2*H:3*H]); o = jax.nn.sigmoid(g[:, 3*H:4*H])
        c = fgt * c + i * gg
        return o * jnp.tanh(c), c

    for ti in range(t):
        h1, c1 = cell(xs[:, ti, :], h1, c1, p["wih1"], p["whh1"], p["b1"])
        h2, c2 = cell(h1, h2, c2, p["wih2"], p["whh2"], p["b2"])

    a_norm = build_gcn_adj(edge_index, edge_weight, n)
    z = a_norm @ (h2 @ p["wg1"]) + p["bg1"]
    z = jnp.maximum(z, 0.0)
    z = a_norm @ (z @ p["wg2"]) + p["bg2"]
    z = jnp.maximum(z @ p["wf1"] + p["bf1"], 0.0)
    z = z @ p["wf2"] + p["bf2"]
    return z.reshape(b, a_num, OUTPUT_SIZE)


# ---------------------------------------------------------------------------
# Deterministic parameter init (shapes follow the PyTorch module).
# ---------------------------------------------------------------------------
def init_params(key):
    H, F, G = LSTM_HIDDEN, LSTM_INPUT, GNN_HIDDEN
    keys = jax.random.split(key, 16)

    def u(k, shape, fan_in):
        s = 1.0 / np.sqrt(fan_in)
        return jax.random.uniform(k, shape, jnp.float32, -s, s)

    return {
        # LSTM layer 1 (stored transposed: x @ W); gate order i, f, g, o
        "wih1": u(keys[0], (F, 4 * H), H),
        "whh1": u(keys[1], (H, 4 * H), H),
        "b1":   u(keys[2], (1, 4 * H), H),     # b_ih + b_hh folded together
        # LSTM layer 2
        "wih2": u(keys[3], (H, 4 * H), H),
        "whh2": u(keys[4], (H, 4 * H), H),
        "b2":   u(keys[5], (1, 4 * H), H),
        # GCN layers
        "wg1": u(keys[6], (H, G), H),
        "bg1": u(keys[7], (1, G), H),
        "wg2": u(keys[8], (G, G), G),
        "bg2": u(keys[9], (1, G), G),
        # MLP head
        "wf1": u(keys[10], (G, G // 2), G),
        "bf1": u(keys[11], (1, G // 2), G),
        "wf2": u(keys[12], (G // 2, OUTPUT_SIZE), G // 2),
        "bf2": u(keys[13], (1, OUTPUT_SIZE), G // 2),
    }


if __name__ == "__main__":
    key = jax.random.PRNGKey(0)
    k_x, k_w, k_p, k_e = jax.random.split(key, 4)

    x = jax.random.normal(k_x, (BATCH, NUM_ASSETS, SEQ_LEN, LSTM_INPUT),
                          jnp.float32)
    n_nodes = BATCH * NUM_ASSETS
    # deterministic edges (no self loops), positive correlation weights
    src = jnp.arange(NUM_EDGES, dtype=jnp.int32) % n_nodes
    dst = (jnp.arange(NUM_EDGES, dtype=jnp.int32) * 3 + 1) % n_nodes
    edge_index = jnp.stack([src, dst], axis=0)              # [2, E]
    edge_weight = jax.random.uniform(k_w, (NUM_EDGES,), jnp.float32, 0.1, 1.0)

    params = init_params(k_p)
    kparams = pack_kernel_params(params)                    # one-time transform

    # static graph -> build normalized adjacency once, outside the jitted path
    a_norm = jax.block_until_ready(build_gcn_adj(edge_index, edge_weight,
                                                 n_nodes))

    fwd = jax.jit(lstm_gnn_forward)
    out = fwd(x, a_norm, kparams)
    out = jax.block_until_ready(out)

    ref = reference_forward(x, edge_index, edge_weight, params)
    assert out.shape == (BATCH, NUM_ASSETS, OUTPUT_SIZE)
    # Tolerance loosened vs. the pure-f32 reference because matmul weights /
    # activations are fed to the MXU in bf16 (per perf review); structural
    # bugs would produce errors orders of magnitude larger.
    np.testing.assert_allclose(np.asarray(out), np.asarray(ref),
                               rtol=2e-2, atol=2e-2)
    print("KERNEL_OK")
</pallas_src>

<mosaic_0001>
module attributes {stable_mosaic.version = 11 : i64} {
  func.func @fused_kernel(%arg0: memref<64x6xbf16, #tpu.memory_space<vmem>>, %arg1: memref<8x8xf32, #tpu.memory_space<vmem>>, %arg2: memref<6x128xbf16, #tpu.memory_space<vmem>>, %arg3: memref<32x128xbf16, #tpu.memory_space<vmem>>, %arg4: memref<32x128xbf16, #tpu.memory_space<vmem>>, %arg5: memref<32x128xbf16, #tpu.memory_space<vmem>>, %arg6: memref<1x128xf32, #tpu.memory_space<vmem>>, %arg7: memref<32x128xbf16, #tpu.memory_space<vmem>>, %arg8: memref<1x128xf32, #tpu.memory_space<vmem>>, %arg9: memref<128x128xbf16, #tpu.memory_space<vmem>>, %arg10: memref<1x128xf32, #tpu.memory_space<vmem>>, %arg11: memref<128x128xbf16, #tpu.memory_space<vmem>>, %arg12: memref<1x128xf32, #tpu.memory_space<vmem>>, %arg13: memref<128x128xbf16, #tpu.memory_space<vmem>>, %arg14: memref<1x128xf32, #tpu.memory_space<vmem>>, %arg15: memref<8x128xf32, #tpu.memory_space<vmem>>) attributes {dimension_semantics = [], scalar_prefetch = 0 : i64, scratch_operands = 0 : i64, tpu.core_type = #tpu.core_type<tc>} {
    %c0 = arith.constant 0 : index
    %c0_0 = arith.constant 0 : index
    %0 = vector.load %arg0[%c0, %c0_0] : memref<64x6xbf16, #tpu.memory_space<vmem>>, vector<64x6xbf16>
    %c0_1 = arith.constant 0 : index
    %c0_2 = arith.constant 0 : index
    %1 = vector.load %arg2[%c0_1, %c0_2] : memref<6x128xbf16, #tpu.memory_space<vmem>>, vector<6x128xbf16>
    %cst = arith.constant dense<0.000000e+00> : vector<64x128xf32>
    %2 = tpu.matmul %0, %1, %cst {dimension_numbers = #tpu.dot_dimension_numbers<[1], [0], [0], [1], [0, 0, 1, 1], [], []>} : vector<64x6xbf16>, vector<6x128xbf16>, vector<64x128xf32> -> vector<64x128xf32>
    %c0_3 = arith.constant 0 : index
    %c0_4 = arith.constant 0 : index
    %3 = vector.load %arg3[%c0_3, %c0_4] : memref<32x128xbf16, #tpu.memory_space<vmem>>, vector<32x128xbf16>
    %c0_5 = arith.constant 0 : index
    %c0_6 = arith.constant 0 : index
    %4 = vector.load %arg4[%c0_5, %c0_6] : memref<32x128xbf16, #tpu.memory_space<vmem>>, vector<32x128xbf16>
    %c0_7 = arith.constant 0 : index
    %c0_8 = arith.constant 0 : index
    %5 = vector.load %arg5[%c0_7, %c0_8] : memref<32x128xbf16, #tpu.memory_space<vmem>>, vector<32x128xbf16>
    %c0_9 = arith.constant 0 : index
    %c0_10 = arith.constant 0 : index
    %6 = vector.load %arg6[%c0_9, %c0_10] : memref<1x128xf32, #tpu.memory_space<vmem>>, vector<1x128xf32>
    %7 = vector.shape_cast %6 : vector<1x128xf32> to vector<1x128xf32>
    %8 = vector.broadcast %7 : vector<1x128xf32> to vector<8x128xf32>
    %cst_11 = arith.constant 0.000000e+00 : f32
    %9 = vector.broadcast %cst_11 : f32 to vector<8x32xf32>
    %10 = vector.extract_strided_slice %2 {offsets = [0, 0], sizes = [8, 128], strides = [1, 1]} : vector<64x128xf32> to vector<8x128xf32>
    %11 = arith.truncf %9 : vector<8x32xf32> to vector<8x32xbf16>
    %cst_12 = arith.constant dense<0.000000e+00> : vector<8x128xf32>
    %12 = tpu.matmul %11, %3, %cst_12 {dimension_numbers = #tpu.dot_dimension_numbers<[1], [0], [0], [1], [0, 0, 1, 1], [], []>} : vector<8x32xbf16>, vector<32x128xbf16>, vector<8x128xf32> -> vector<8x128xf32>
    %13 = arith.addf %10, %12 : vector<8x128xf32>
    %14 = arith.negf %13 : vector<8x128xf32>
    %15 = math.exp %14 : vector<8x128xf32>
    %cst_13 = arith.constant 1.000000e+00 : f32
    %16 = vector.broadcast %cst_13 : f32 to vector<8x128xf32>
    %17 = arith.addf %16, %15 : vector<8x128xf32>
    %18 = arith.divf %16, %17 : vector<8x128xf32>
    %19 = vector.extract_strided_slice %18 {offsets = [0, 0], sizes = [8, 32], strides = [1, 1]} : vector<8x128xf32> to vector<8x32xf32>
    %20 = vector.extract_strided_slice %18 {offsets = [0, 32], sizes = [8, 32], strides = [1, 1]} : vector<8x128xf32> to vector<8x32xf32>
    %21 = vector.extract_strided_slice %18 {offsets = [0, 96], sizes = [8, 32], strides = [1, 1]} : vector<8x128xf32> to vector<8x32xf32>
    %22 = vector.extract_strided_slice %13 {offsets = [0, 64], sizes = [8, 32], strides = [1, 1]} : vector<8x128xf32> to vector<8x32xf32>
    %23 = math.tanh %22 : vector<8x32xf32>
    %24 = arith.mulf %20, %9 : vector<8x32xf32>
    %25 = arith.mulf %19, %23 : vector<8x32xf32>
    %26 = arith.addf %24, %25 : vector<8x32xf32>
    %27 = math.tanh %26 : vector<8x32xf32>
    %28 = arith.mulf %21, %27 : vector<8x32xf32>
    %29 = arith.truncf %9 : vector<8x32xf32> to vector<8x32xbf16>
    %cst_14 = arith.constant dense<0.000000e+00> : vector<8x128xf32>
    %30 = tpu.matmul %29, %5, %cst_14 {dimension_numbers = #tpu.dot_dimension_numbers<[1], [0], [0], [1], [0, 0, 1, 1], [], []>} : vector<8x32xbf16>, vector<32x128xbf16>, vector<8x128xf32> -> vector<8x128xf32>
    %31 = arith.truncf %28 : vector<8x32xf32> to vector<8x32xbf16>
    %cst_15 = arith.constant dense<0.000000e+00> : vector<8x128xf32>
    %32 = tpu.matmul %31, %4, %cst_15 {dimension_numbers = #tpu.dot_dimension_numbers<[1], [0], [0], [1], [0, 0, 1, 1], [], []>} : vector<8x32xbf16>, vector<32x128xbf16>, vector<8x128xf32> -> vector<8x128xf32>
    %33 = arith.addf %30, %32 : vector<8x128xf32>
    %34 = arith.addf %33, %8 : vector<8x128xf32>
    %35 = arith.negf %34 : vector<8x128xf32>
    %36 = math.exp %35 : vector<8x128xf32>
    %cst_16 = arith.constant 1.000000e+00 : f32
    %37 = vector.broadcast %cst_16 : f32 to vector<8x128xf32>
    %38 = arith.addf %37, %36 : vector<8x128xf32>
    %39 = arith.divf %37, %38 : vector<8x128xf32>
    %40 = vector.extract_strided_slice %39 {offsets = [0, 0], sizes = [8, 32], strides = [1, 1]} : vector<8x128xf32> to vector<8x32xf32>
    %41 = vector.extract_strided_slice %39 {offsets = [0, 32], sizes = [8, 32], strides = [1, 1]} : vector<8x128xf32> to vector<8x32xf32>
    %42 = vector.extract_strided_slice %39 {offsets = [0, 96], sizes = [8, 32], strides = [1, 1]} : vector<8x128xf32> to vector<8x32xf32>
    %43 = vector.extract_strided_slice %34 {offsets = [0, 64], sizes = [8, 32], strides = [1, 1]} : vector<8x128xf32> to vector<8x32xf32>
    %44 = math.tanh %43 : vector<8x32xf32>
    %45 = arith.mulf %41, %9 : vector<8x32xf32>
    %46 = arith.mulf %40, %44 : vector<8x32xf32>
    %47 = arith.addf %45, %46 : vector<8x32xf32>
    %48 = math.tanh %47 : vector<8x32xf32>
    %49 = arith.mulf %42, %48 : vector<8x32xf32>
    %50 = vector.extract_strided_slice %2 {offsets = [8, 0], sizes = [8, 128], strides = [1, 1]} : vector<64x128xf32> to vector<8x128xf32>
    %51 = arith.truncf %28 : vector<8x32xf32> to vector<8x32xbf16>
    %cst_17 = arith.constant dense<0.000000e+00> : vector<8x128xf32>
    %52 = tpu.matmul %51, %3, %cst_17 {dimension_numbers = #tpu.dot_dimension_numbers<[1], [0], [0], [1], [0, 0, 1, 1], [], []>} : vector<8x32xbf16>, vector<32x128xbf16>, vector<8x128xf32> -> vector<8x128xf32>
    %53 = arith.addf %50, %52 : vector<8x128xf32>
    %54 = arith.negf %53 : vector<8x128xf32>
    %55 = math.exp %54 : vector<8x128xf32>
    %cst_18 = arith.constant 1.000000e+00 : f32
    %56 = vector.broadcast %cst_18 : f32 to vector<8x128xf32>
    %57 = arith.addf %56, %55 : vector<8x128xf32>
    %58 = arith.divf %56, %57 : vector<8x128xf32>
    %59 = vector.extract_strided_slice %58 {offsets = [0, 0], sizes = [8, 32], strides = [1, 1]} : vector<8x128xf32> to vector<8x32xf32>
    %60 = vector.extract_strided_slice %58 {offsets = [0, 32], sizes = [8, 32], strides = [1, 1]} : vector<8x128xf32> to vector<8x32xf32>
    %61 = vector.extract_strided_slice %58 {offsets = [0, 96], sizes = [8, 32], strides = [1, 1]} : vector<8x128xf32> to vector<8x32xf32>
    %62 = vector.extract_strided_slice %53 {offsets = [0, 64], sizes = [8, 32], strides = [1, 1]} : vector<8x128xf32> to vector<8x32xf32>
    %63 = math.tanh %62 : vector<8x32xf32>
    %64 = arith.mulf %60, %26 : vector<8x32xf32>
    %65 = arith.mulf %59, %63 : vector<8x32xf32>
    %66 = arith.addf %64, %65 : vector<8x32xf32>
    %67 = math.tanh %66 : vector<8x32xf32>
    %68 = arith.mulf %61, %67 : vector<8x32xf32>
    %69 = arith.truncf %49 : vector<8x32xf32> to vector<8x32xbf16>
    %cst_19 = arith.constant dense<0.000000e+00> : vector<8x128xf32>
    %70 = tpu.matmul %69, %5, %cst_19 {dimension_numbers = #tpu.dot_dimension_numbers<[1], [0], [0], [1], [0, 0, 1, 1], [], []>} : vector<8x32xbf16>, vector<32x128xbf16>, vector<8x128xf32> -> vector<8x128xf32>
    %71 = arith.truncf %68 : vector<8x32xf32> to vector<8x32xbf16>
    %cst_20 = arith.constant dense<0.000000e+00> : vector<8x128xf32>
    %72 = tpu.matmul %71, %4, %cst_20 {dimension_numbers = #tpu.dot_dimension_numbers<[1], [0], [0], [1], [0, 0, 1, 1], [], []>} : vector<8x32xbf16>, vector<32x128xbf16>, vector<8x128xf32> -> vector<8x128xf32>
    %73 = arith.addf %70, %72 : vector<8x128xf32>
    %74 = arith.addf %73, %8 : vector<8x128xf32>
    %75 = arith.negf %74 : vector<8x128xf32>
    %76 = math.exp %75 : vector<8x128xf32>
    %cst_21 = arith.constant 1.000000e+00 : f32
    %77 = vector.broadcast %cst_21 : f32 to vector<8x128xf32>
    %78 = arith.addf %77, %76 : vector<8x128xf32>
    %79 = arith.divf %77, %78 : vector<8x128xf32>
    %80 = vector.extract_strided_slice %79 {offsets = [0, 0], sizes = [8, 32], strides = [1, 1]} : vector<8x128xf32> to vector<8x32xf32>
    %81 = vector.extract_strided_slice %79 {offsets = [0, 32], sizes = [8, 32], strides = [1, 1]} : vector<8x128xf32> to vector<8x32xf32>
    %82 = vector.extract_strided_slice %79 {offsets = [0, 96], sizes = [8, 32], strides = [1, 1]} : vector<8x128xf32> to vector<8x32xf32>
    %83 = vector.extract_strided_slice %74 {offsets = [0, 64], sizes = [8, 32], strides = [1, 1]} : vector<8x128xf32> to vector<8x32xf32>
    %84 = math.tanh %83 : vector<8x32xf32>
    %85 = arith.mulf %81, %47 : vector<8x32xf32>
    %86 = arith.mulf %80, %84 : vector<8x32xf32>
    %87 = arith.addf %85, %86 : vector<8x32xf32>
    %88 = math.tanh %87 : vector<8x32xf32>
    %89 = arith.mulf %82, %88 : vector<8x32xf32>
    %90 = vector.extract_strided_slice %2 {offsets = [16, 0], sizes = [8, 128], strides = [1, 1]} : vector<64x128xf32> to vector<8x128xf32>
    %91 = arith.truncf %68 : vector<8x32xf32> to vector<8x32xbf16>
    %cst_22 = arith.constant dense<0.000000e+00> : vector<8x128xf32>
    %92 = tpu.matmul %91, %3, %cst_22 {dimension_numbers = #tpu.dot_dimension_numbers<[1], [0], [0], [1], [0, 0, 1, 1], [], []>} : vector<8x32xbf16>, vector<32x128xbf16>, vector<8x128xf32> -> vector<8x128xf32>
    %93 = arith.addf %90, %92 : vector<8x128xf32>
    %94 = arith.negf %93 : vector<8x128xf32>
    %95 = math.exp %94 : vector<8x128xf32>
    %cst_23 = arith.constant 1.000000e+00 : f32
    %96 = vector.broadcast %cst_23 : f32 to vector<8x128xf32>
    %97 = arith.addf %96, %95 : vector<8x128xf32>
    %98 = arith.divf %96, %97 : vector<8x128xf32>
    %99 = vector.extract_strided_slice %98 {offsets = [0, 0], sizes = [8, 32], strides = [1, 1]} : vector<8x128xf32> to vector<8x32xf32>
    %100 = vector.extract_strided_slice %98 {offsets = [0, 32], sizes = [8, 32], strides = [1, 1]} : vector<8x128xf32> to vector<8x32xf32>
    %101 = vector.extract_strided_slice %98 {offsets = [0, 96], sizes = [8, 32], strides = [1, 1]} : vector<8x128xf32> to vector<8x32xf32>
    %102 = vector.extract_strided_slice %93 {offsets = [0, 64], sizes = [8, 32], strides = [1, 1]} : vector<8x128xf32> to vector<8x32xf32>
    %103 = math.tanh %102 : vector<8x32xf32>
    %104 = arith.mulf %100, %66 : vector<8x32xf32>
    %105 = arith.mulf %99, %103 : vector<8x32xf32>
    %106 = arith.addf %104, %105 : vector<8x32xf32>
    %107 = math.tanh %106 : vector<8x32xf32>
    %108 = arith.mulf %101, %107 : vector<8x32xf32>
    %109 = arith.truncf %89 : vector<8x32xf32> to vector<8x32xbf16>
    %cst_24 = arith.constant dense<0.000000e+00> : vector<8x128xf32>
    %110 = tpu.matmul %109, %5, %cst_24 {dimension_numbers = #tpu.dot_dimension_numbers<[1], [0], [0], [1], [0, 0, 1, 1], [], []>} : vector<8x32xbf16>, vector<32x128xbf16>, vector<8x128xf32> -> vector<8x128xf32>
    %111 = arith.truncf %108 : vector<8x32xf32> to vector<8x32xbf16>
    %cst_25 = arith.constant dense<0.000000e+00> : vector<8x128xf32>
    %112 = tpu.matmul %111, %4, %cst_25 {dimension_numbers = #tpu.dot_dimension_numbers<[1], [0], [0], [1], [0, 0, 1, 1], [], []>} : vector<8x32xbf16>, vector<32x128xbf16>, vector<8x128xf32> -> vector<8x128xf32>
    %113 = arith.addf %110, %112 : vector<8x128xf32>
    %114 = arith.addf %113, %8 : vector<8x128xf32>
    %115 = arith.negf %114 : vector<8x128xf32>
    %116 = math.exp %115 : vector<8x128xf32>
    %cst_26 = arith.constant 1.000000e+00 : f32
    %117 = vector.broadcast %cst_26 : f32 to vector<8x128xf32>
    %118 = arith.addf %117, %116 : vector<8x128xf32>
    %119 = arith.divf %117, %118 : vector<8x128xf32>
    %120 = vector.extract_strided_slice %119 {offsets = [0, 0], sizes = [8, 32], strides = [1, 1]} : vector<8x128xf32> to vector<8x32xf32>
    %121 = vector.extract_strided_slice %119 {offsets = [0, 32], sizes = [8, 32], strides = [1, 1]} : vector<8x128xf32> to vector<8x32xf32>
    %122 = vector.extract_strided_slice %119 {offsets = [0, 96], sizes = [8, 32], strides = [1, 1]} : vector<8x128xf32> to vector<8x32xf32>
    %123 = vector.extract_strided_slice %114 {offsets = [0, 64], sizes = [8, 32], strides = [1, 1]} : vector<8x128xf32> to vector<8x32xf32>
    %124 = math.tanh %123 : vector<8x32xf32>
    %125 = arith.mulf %121, %87 : vector<8x32xf32>
    %126 = arith.mulf %120, %124 : vector<8x32xf32>
    %127 = arith.addf %125, %126 : vector<8x32xf32>
    %128 = math.tanh %127 : vector<8x32xf32>
    %129 = arith.mulf %122, %128 : vector<8x32xf32>
    %130 = vector.extract_strided_slice %2 {offsets = [24, 0], sizes = [8, 128], strides = [1, 1]} : vector<64x128xf32> to vector<8x128xf32>
    %131 = arith.truncf %108 : vector<8x32xf32> to vector<8x32xbf16>
    %cst_27 = arith.constant dense<0.000000e+00> : vector<8x128xf32>
    %132 = tpu.matmul %131, %3, %cst_27 {dimension_numbers = #tpu.dot_dimension_numbers<[1], [0], [0], [1], [0, 0, 1, 1], [], []>} : vector<8x32xbf16>, vector<32x128xbf16>, vector<8x128xf32> -> vector<8x128xf32>
    %133 = arith.addf %130, %132 : vector<8x128xf32>
    %134 = arith.negf %133 : vector<8x128xf32>
    %135 = math.exp %134 : vector<8x128xf32>
    %cst_28 = arith.constant 1.000000e+00 : f32
    %136 = vector.broadcast %cst_28 : f32 to vector<8x128xf32>
    %137 = arith.addf %136, %135 : vector<8x128xf32>
    %138 = arith.divf %136, %137 : vector<8x128xf32>
    %139 = vector.extract_strided_slice %138 {offsets = [0, 0], sizes = [8, 32], strides = [1, 1]} : vector<8x128xf32> to vector<8x32xf32>
    %140 = vector.extract_strided_slice %138 {offsets = [0, 32], sizes = [8, 32], strides = [1, 1]} : vector<8x128xf32> to vector<8x32xf32>
    %141 = vector.extract_strided_slice %138 {offsets = [0, 96], sizes = [8, 32], strides = [1, 1]} : vector<8x128xf32> to vector<8x32xf32>
    %142 = vector.extract_strided_slice %133 {offsets = [0, 64], sizes = [8, 32], strides = [1, 1]} : vector<8x128xf32> to vector<8x32xf32>
    %143 = math.tanh %142 : vector<8x32xf32>
    %144 = arith.mulf %140, %106 : vector<8x32xf32>
    %145 = arith.mulf %139, %143 : vector<8x32xf32>
    %146 = arith.addf %144, %145 : vector<8x32xf32>
    %147 = math.tanh %146 : vector<8x32xf32>
    %148 = arith.mulf %141, %147 : vector<8x32xf32>
    %149 = arith.truncf %129 : vector<8x32xf32> to vector<8x32xbf16>
    %cst_29 = arith.constant dense<0.000000e+00> : vector<8x128xf32>
    %150 = tpu.matmul %149, %5, %cst_29 {dimension_numbers = #tpu.dot_dimension_numbers<[1], [0], [0], [1], [0, 0, 1, 1], [], []>} : vector<8x32xbf16>, vector<32x128xbf16>, vector<8x128xf32> -> vector<8x128xf32>
    %151 = arith.truncf %148 : vector<8x32xf32> to vector<8x32xbf16>
    %cst_30 = arith.constant dense<0.000000e+00> : vector<8x128xf32>
    %152 = tpu.matmul %151, %4, %cst_30 {dimension_numbers = #tpu.dot_dimension_numbers<[1], [0], [0], [1], [0, 0, 1, 1], [], []>} : vector<8x32xbf16>, vector<32x128xbf16>, vector<8x128xf32> -> vector<8x128xf32>
    %153 = arith.addf %150, %152 : vector<8x128xf32>
    %154 = arith.addf %153, %8 : vector<8x128xf32>
    %155 = arith.negf %154 : vector<8x128xf32>
    %156 = math.exp %155 : vector<8x128xf32>
    %cst_31 = arith.constant 1.000000e+00 : f32
    %157 = vector.broadcast %cst_31 : f32 to vector<8x128xf32>
    %158 = arith.addf %157, %156 : vector<8x128xf32>
    %159 = arith.divf %157, %158 : vector<8x128xf32>
    %160 = vector.extract_strided_slice %159 {offsets = [0, 0], sizes = [8, 32], strides = [1, 1]} : vector<8x128xf32> to vector<8x32xf32>
    %161 = vector.extract_strided_slice %159 {offsets = [0, 32], sizes = [8, 32], strides = [1, 1]} : vector<8x128xf32> to vector<8x32xf32>
    %162 = vector.extract_strided_slice %159 {offsets = [0, 96], sizes = [8, 32], strides = [1, 1]} : vector<8x128xf32> to vector<8x32xf32>
    %163 = vector.extract_strided_slice %154 {offsets = [0, 64], sizes = [8, 32], strides = [1, 1]} : vector<8x128xf32> to vector<8x32xf32>
    %164 = math.tanh %163 : vector<8x32xf32>
    %165 = arith.mulf %161, %127 : vector<8x32xf32>
    %166 = arith.mulf %160, %164 : vector<8x32xf32>
    %167 = arith.addf %165, %166 : vector<8x32xf32>
    %168 = math.tanh %167 : vector<8x32xf32>
    %169 = arith.mulf %162, %168 : vector<8x32xf32>
    %170 = vector.extract_strided_slice %2 {offsets = [32, 0], sizes = [8, 128], strides = [1, 1]} : vector<64x128xf32> to vector<8x128xf32>
    %171 = arith.truncf %148 : vector<8x32xf32> to vector<8x32xbf16>
    %cst_32 = arith.constant dense<0.000000e+00> : vector<8x128xf32>
    %172 = tpu.matmul %171, %3, %cst_32 {dimension_numbers = #tpu.dot_dimension_numbers<[1], [0], [0], [1], [0, 0, 1, 1], [], []>} : vector<8x32xbf16>, vector<32x128xbf16>, vector<8x128xf32> -> vector<8x128xf32>
    %173 = arith.addf %170, %172 : vector<8x128xf32>
    %174 = arith.negf %173 : vector<8x128xf32>
    %175 = math.exp %174 : vector<8x128xf32>
    %cst_33 = arith.constant 1.000000e+00 : f32
    %176 = vector.broadcast %cst_33 : f32 to vector<8x128xf32>
    %177 = arith.addf %176, %175 : vector<8x128xf32>
    %178 = arith.divf %176, %177 : vector<8x128xf32>
    %179 = vector.extract_strided_slice %178 {offsets = [0, 0], sizes = [8, 32], strides = [1, 1]} : vector<8x128xf32> to vector<8x32xf32>
    %180 = vector.extract_strided_slice %178 {offsets = [0, 32], sizes = [8, 32], strides = [1, 1]} : vector<8x128xf32> to vector<8x32xf32>
    %181 = vector.extract_strided_slice %178 {offsets = [0, 96], sizes = [8, 32], strides = [1, 1]} : vector<8x128xf32> to vector<8x32xf32>
    %182 = vector.extract_strided_slice %173 {offsets = [0, 64], sizes = [8, 32], strides = [1, 1]} : vector<8x128xf32> to vector<8x32xf32>
    %183 = math.tanh %182 : vector<8x32xf32>
    %184 = arith.mulf %180, %146 : vector<8x32xf32>
    %185 = arith.mulf %179, %183 : vector<8x32xf32>
    %186 = arith.addf %184, %185 : vector<8x32xf32>
    %187 = math.tanh %186 : vector<8x32xf32>
    %188 = arith.mulf %181, %187 : vector<8x32xf32>
    %189 = arith.truncf %169 : vector<8x32xf32> to vector<8x32xbf16>
    %cst_34 = arith.constant dense<0.000000e+00> : vector<8x128xf32>
    %190 = tpu.matmul %189, %5, %cst_34 {dimension_numbers = #tpu.dot_dimension_numbers<[1], [0], [0], [1], [0, 0, 1, 1], [], []>} : vector<8x32xbf16>, vector<32x128xbf16>, vector<8x128xf32> -> vector<8x128xf32>
    %191 = arith.truncf %188 : vector<8x32xf32> to vector<8x32xbf16>
    %cst_35 = arith.constant dense<0.000000e+00> : vector<8x128xf32>
    %192 = tpu.matmul %191, %4, %cst_35 {dimension_numbers = #tpu.dot_dimension_numbers<[1], [0], [0], [1], [0, 0, 1, 1], [], []>} : vector<8x32xbf16>, vector<32x128xbf16>, vector<8x128xf32> -> vector<8x128xf32>
    %193 = arith.addf %190, %192 : vector<8x128xf32>
    %194 = arith.addf %193, %8 : vector<8x128xf32>
    %195 = arith.negf %194 : vector<8x128xf32>
    %196 = math.exp %195 : vector<8x128xf32>
    %cst_36 = arith.constant 1.000000e+00 : f32
    %197 = vector.broadcast %cst_36 : f32 to vector<8x128xf32>
    %198 = arith.addf %197, %196 : vector<8x128xf32>
    %199 = arith.divf %197, %198 : vector<8x128xf32>
    %200 = vector.extract_strided_slice %199 {offsets = [0, 0], sizes = [8, 32], strides = [1, 1]} : vector<8x128xf32> to vector<8x32xf32>
    %201 = vector.extract_strided_slice %199 {offsets = [0, 32], sizes = [8, 32], strides = [1, 1]} : vector<8x128xf32> to vector<8x32xf32>
    %202 = vector.extract_strided_slice %199 {offsets = [0, 96], sizes = [8, 32], strides = [1, 1]} : vector<8x128xf32> to vector<8x32xf32>
    %203 = vector.extract_strided_slice %194 {offsets = [0, 64], sizes = [8, 32], strides = [1, 1]} : vector<8x128xf32> to vector<8x32xf32>
    %204 = math.tanh %203 : vector<8x32xf32>
    %205 = arith.mulf %201, %167 : vector<8x32xf32>
    %206 = arith.mulf %200, %204 : vector<8x32xf32>
    %207 = arith.addf %205, %206 : vector<8x32xf32>
    %208 = math.tanh %207 : vector<8x32xf32>
    %209 = arith.mulf %202, %208 : vector<8x32xf32>
    %210 = vector.extract_strided_slice %2 {offsets = [40, 0], sizes = [8, 128], strides = [1, 1]} : vector<64x128xf32> to vector<8x128xf32>
    %211 = arith.truncf %188 : vector<8x32xf32> to vector<8x32xbf16>
    %cst_37 = arith.constant dense<0.000000e+00> : vector<8x128xf32>
    %212 = tpu.matmul %211, %3, %cst_37 {dimension_numbers = #tpu.dot_dimension_numbers<[1], [0], [0], [1], [0, 0, 1, 1], [], []>} : vector<8x32xbf16>, vector<32x128xbf16>, vector<8x128xf32> -> vector<8x128xf32>
    %213 = arith.addf %210, %212 : vector<8x128xf32>
    %214 = arith.negf %213 : vector<8x128xf32>
    %215 = math.exp %214 : vector<8x128xf32>
    %cst_38 = arith.constant 1.000000e+00 : f32
    %216 = vector.broadcast %cst_38 : f32 to vector<8x128xf32>
    %217 = arith.addf %216, %215 : vector<8x128xf32>
    %218 = arith.divf %216, %217 : vector<8x128xf32>
    %219 = vector.extract_strided_slice %218 {offsets = [0, 0], sizes = [8, 32], strides = [1, 1]} : vector<8x128xf32> to vector<8x32xf32>
    %220 = vector.extract_strided_slice %218 {offsets = [0, 32], sizes = [8, 32], strides = [1, 1]} : vector<8x128xf32> to vector<8x32xf32>
    %221 = vector.extract_strided_slice %218 {offsets = [0, 96], sizes = [8, 32], strides = [1, 1]} : vector<8x128xf32> to vector<8x32xf32>
    %222 = vector.extract_strided_slice %213 {offsets = [0, 64], sizes = [8, 32], strides = [1, 1]} : vector<8x128xf32> to vector<8x32xf32>
    %223 = math.tanh %222 : vector<8x32xf32>
    %224 = arith.mulf %220, %186 : vector<8x32xf32>
    %225 = arith.mulf %219, %223 : vector<8x32xf32>
    %226 = arith.addf %224, %225 : vector<8x32xf32>
    %227 = math.tanh %226 : vector<8x32xf32>
    %228 = arith.mulf %221, %227 : vector<8x32xf32>
    %229 = arith.truncf %209 : vector<8x32xf32> to vector<8x32xbf16>
    %cst_39 = arith.constant dense<0.000000e+00> : vector<8x128xf32>
    %230 = tpu.matmul %229, %5, %cst_39 {dimension_numbers = #tpu.dot_dimension_numbers<[1], [0], [0], [1], [0, 0, 1, 1], [], []>} : vector<8x32xbf16>, vector<32x128xbf16>, vector<8x128xf32> -> vector<8x128xf32>
    %231 = arith.truncf %228 : vector<8x32xf32> to vector<8x32xbf16>
    %cst_40 = arith.constant dense<0.000000e+00> : vector<8x128xf32>
    %232 = tpu.matmul %231, %4, %cst_40 {dimension_numbers = #tpu.dot_dimension_numbers<[1], [0], [0], [1], [0, 0, 1, 1], [], []>} : vector<8x32xbf16>, vector<32x128xbf16>, vector<8x128xf32> -> vector<8x128xf32>
    %233 = arith.addf %230, %232 : vector<8x128xf32>
    %234 = arith.addf %233, %8 : vector<8x128xf32>
    %235 = arith.negf %234 : vector<8x128xf32>
    %236 = math.exp %235 : vector<8x128xf32>
    %cst_41 = arith.constant 1.000000e+00 : f32
    %237 = vector.broadcast %cst_41 : f32 to vector<8x128xf32>
    %238 = arith.addf %237, %236 : vector<8x128xf32>
    %239 = arith.divf %237, %238 : vector<8x128xf32>
    %240 = vector.extract_strided_slice %239 {offsets = [0, 0], sizes = [8, 32], strides = [1, 1]} : vector<8x128xf32> to vector<8x32xf32>
    %241 = vector.extract_strided_slice %239 {offsets = [0, 32], sizes = [8, 32], strides = [1, 1]} : vector<8x128xf32> to vector<8x32xf32>
    %242 = vector.extract_strided_slice %239 {offsets = [0, 96], sizes = [8, 32], strides = [1, 1]} : vector<8x128xf32> to vector<8x32xf32>
    %243 = vector.extract_strided_slice %234 {offsets = [0, 64], sizes = [8, 32], strides = [1, 1]} : vector<8x128xf32> to vector<8x32xf32>
    %244 = math.tanh %243 : vector<8x32xf32>
    %245 = arith.mulf %241, %207 : vector<8x32xf32>
    %246 = arith.mulf %240, %244 : vector<8x32xf32>
    %247 = arith.addf %245, %246 : vector<8x32xf32>
    %248 = math.tanh %247 : vector<8x32xf32>
    %249 = arith.mulf %242, %248 : vector<8x32xf32>
    %250 = vector.extract_strided_slice %2 {offsets = [48, 0], sizes = [8, 128], strides = [1, 1]} : vector<64x128xf32> to vector<8x128xf32>
    %251 = arith.truncf %228 : vector<8x32xf32> to vector<8x32xbf16>
    %cst_42 = arith.constant dense<0.000000e+00> : vector<8x128xf32>
    %252 = tpu.matmul %251, %3, %cst_42 {dimension_numbers = #tpu.dot_dimension_numbers<[1], [0], [0], [1], [0, 0, 1, 1], [], []>} : vector<8x32xbf16>, vector<32x128xbf16>, vector<8x128xf32> -> vector<8x128xf32>
    %253 = arith.addf %250, %252 : vector<8x128xf32>
    %254 = arith.negf %253 : vector<8x128xf32>
    %255 = math.exp %254 : vector<8x128xf32>
    %cst_43 = arith.constant 1.000000e+00 : f32
    %256 = vector.broadcast %cst_43 : f32 to vector<8x128xf32>
    %257 = arith.addf %256, %255 : vector<8x128xf32>
    %258 = arith.divf %256, %257 : vector<8x128xf32>
    %259 = vector.extract_strided_slice %258 {offsets = [0, 0], sizes = [8, 32], strides = [1, 1]} : vector<8x128xf32> to vector<8x32xf32>
    %260 = vector.extract_strided_slice %258 {offsets = [0, 32], sizes = [8, 32], strides = [1, 1]} : vector<8x128xf32> to vector<8x32xf32>
    %261 = vector.extract_strided_slice %258 {offsets = [0, 96], sizes = [8, 32], strides = [1, 1]} : vector<8x128xf32> to vector<8x32xf32>
    %262 = vector.extract_strided_slice %253 {offsets = [0, 64], sizes = [8, 32], strides = [1, 1]} : vector<8x128xf32> to vector<8x32xf32>
    %263 = math.tanh %262 : vector<8x32xf32>
    %264 = arith.mulf %260, %226 : vector<8x32xf32>
    %265 = arith.mulf %259, %263 : vector<8x32xf32>
    %266 = arith.addf %264, %265 : vector<8x32xf32>
    %267 = math.tanh %266 : vector<8x32xf32>
    %268 = arith.mulf %261, %267 : vector<8x32xf32>
    %269 = arith.truncf %249 : vector<8x32xf32> to vector<8x32xbf16>
    %cst_44 = arith.constant dense<0.000000e+00> : vector<8x128xf32>
    %270 = tpu.matmul %269, %5, %cst_44 {dimension_numbers = #tpu.dot_dimension_numbers<[1], [0], [0], [1], [0, 0, 1, 1], [], []>} : vector<8x32xbf16>, vector<32x128xbf16>, vector<8x128xf32> -> vector<8x128xf32>
    %271 = arith.truncf %268 : vector<8x32xf32> to vector<8x32xbf16>
    %cst_45 = arith.constant dense<0.000000e+00> : vector<8x128xf32>
    %272 = tpu.matmul %271, %4, %cst_45 {dimension_numbers = #tpu.dot_dimension_numbers<[1], [0], [0], [1], [0, 0, 1, 1], [], []>} : vector<8x32xbf16>, vector<32x128xbf16>, vector<8x128xf32> -> vector<8x128xf32>
    %273 = arith.addf %270, %272 : vector<8x128xf32>
    %274 = arith.addf %273, %8 : vector<8x128xf32>
    %275 = arith.negf %274 : vector<8x128xf32>
    %276 = math.exp %275 : vector<8x128xf32>
    %cst_46 = arith.constant 1.000000e+00 : f32
    %277 = vector.broadcast %cst_46 : f32 to vector<8x128xf32>
    %278 = arith.addf %277, %276 : vector<8x128xf32>
    %279 = arith.divf %277, %278 : vector<8x128xf32>
    %280 = vector.extract_strided_slice %279 {offsets = [0, 0], sizes = [8, 32], strides = [1, 1]} : vector<8x128xf32> to vector<8x32xf32>
    %281 = vector.extract_strided_slice %279 {offsets = [0, 32], sizes = [8, 32], strides = [1, 1]} : vector<8x128xf32> to vector<8x32xf32>
    %282 = vector.extract_strided_slice %279 {offsets = [0, 96], sizes = [8, 32], strides = [1, 1]} : vector<8x128xf32> to vector<8x32xf32>
    %283 = vector.extract_strided_slice %274 {offsets = [0, 64], sizes = [8, 32], strides = [1, 1]} : vector<8x128xf32> to vector<8x32xf32>
    %284 = math.tanh %283 : vector<8x32xf32>
    %285 = arith.mulf %281, %247 : vector<8x32xf32>
    %286 = arith.mulf %280, %284 : vector<8x32xf32>
    %287 = arith.addf %285, %286 : vector<8x32xf32>
    %288 = math.tanh %287 : vector<8x32xf32>
    %289 = arith.mulf %282, %288 : vector<8x32xf32>
    %290 = vector.extract_strided_slice %2 {offsets = [56, 0], sizes = [8, 128], strides = [1, 1]} : vector<64x128xf32> to vector<8x128xf32>
    %291 = arith.truncf %268 : vector<8x32xf32> to vector<8x32xbf16>
    %cst_47 = arith.constant dense<0.000000e+00> : vector<8x128xf32>
    %292 = tpu.matmul %291, %3, %cst_47 {dimension_numbers = #tpu.dot_dimension_numbers<[1], [0], [0], [1], [0, 0, 1, 1], [], []>} : vector<8x32xbf16>, vector<32x128xbf16>, vector<8x128xf32> -> vector<8x128xf32>
    %293 = arith.addf %290, %292 : vector<8x128xf32>
    %294 = arith.negf %293 : vector<8x128xf32>
    %295 = math.exp %294 : vector<8x128xf32>
    %cst_48 = arith.constant 1.000000e+00 : f32
    %296 = vector.broadcast %cst_48 : f32 to vector<8x128xf32>
    %297 = arith.addf %296, %295 : vector<8x128xf32>
    %298 = arith.divf %296, %297 : vector<8x128xf32>
    %299 = vector.extract_strided_slice %298 {offsets = [0, 0], sizes = [8, 32], strides = [1, 1]} : vector<8x128xf32> to vector<8x32xf32>
    %300 = vector.extract_strided_slice %298 {offsets = [0, 32], sizes = [8, 32], strides = [1, 1]} : vector<8x128xf32> to vector<8x32xf32>
    %301 = vector.extract_strided_slice %298 {offsets = [0, 96], sizes = [8, 32], strides = [1, 1]} : vector<8x128xf32> to vector<8x32xf32>
    %302 = vector.extract_strided_slice %293 {offsets = [0, 64], sizes = [8, 32], strides = [1, 1]} : vector<8x128xf32> to vector<8x32xf32>
    %303 = math.tanh %302 : vector<8x32xf32>
    %304 = arith.mulf %300, %266 : vector<8x32xf32>
    %305 = arith.mulf %299, %303 : vector<8x32xf32>
    %306 = arith.addf %304, %305 : vector<8x32xf32>
    %307 = math.tanh %306 : vector<8x32xf32>
    %308 = arith.mulf %301, %307 : vector<8x32xf32>
    %309 = arith.truncf %289 : vector<8x32xf32> to vector<8x32xbf16>
    %cst_49 = arith.constant dense<0.000000e+00> : vector<8x128xf32>
    %310 = tpu.matmul %309, %5, %cst_49 {dimension_numbers = #tpu.dot_dimension_numbers<[1], [0], [0], [1], [0, 0, 1, 1], [], []>} : vector<8x32xbf16>, vector<32x128xbf16>, vector<8x128xf32> -> vector<8x128xf32>
    %311 = arith.truncf %308 : vector<8x32xf32> to vector<8x32xbf16>
    %cst_50 = arith.constant dense<0.000000e+00> : vector<8x128xf32>
    %312 = tpu.matmul %311, %4, %cst_50 {dimension_numbers = #tpu.dot_dimension_numbers<[1], [0], [0], [1], [0, 0, 1, 1], [], []>} : vector<8x32xbf16>, vector<32x128xbf16>, vector<8x128xf32> -> vector<8x128xf32>
    %313 = arith.addf %310, %312 : vector<8x128xf32>
    %314 = arith.addf %313, %8 : vector<8x128xf32>
    %315 = arith.negf %314 : vector<8x128xf32>
    %316 = math.exp %315 : vector<8x128xf32>
    %cst_51 = arith.constant 1.000000e+00 : f32
    %317 = vector.broadcast %cst_51 : f32 to vector<8x128xf32>
    %318 = arith.addf %317, %316 : vector<8x128xf32>
    %319 = arith.divf %317, %318 : vector<8x128xf32>
    %320 = vector.extract_strided_slice %319 {offsets = [0, 0], sizes = [8, 32], strides = [1, 1]} : vector<8x128xf32> to vector<8x32xf32>
    %321 = vector.extract_strided_slice %319 {offsets = [0, 32], sizes = [8, 32], strides = [1, 1]} : vector<8x128xf32> to vector<8x32xf32>
    %322 = vector.extract_strided_slice %319 {offsets = [0, 96], sizes = [8, 32], strides = [1, 1]} : vector<8x128xf32> to vector<8x32xf32>
    %323 = vector.extract_strided_slice %314 {offsets = [0, 64], sizes = [8, 32], strides = [1, 1]} : vector<8x128xf32> to vector<8x32xf32>
    %324 = math.tanh %323 : vector<8x32xf32>
    %325 = arith.mulf %321, %287 : vector<8x32xf32>
    %326 = arith.mulf %320, %324 : vector<8x32xf32>
    %327 = arith.addf %325, %326 : vector<8x32xf32>
    %328 = math.tanh %327 : vector<8x32xf32>
    %329 = arith.mulf %322, %328 : vector<8x32xf32>
    %c0_52 = arith.constant 0 : index
    %c0_53 = arith.constant 0 : index
    %330 = vector.load %arg1[%c0_52, %c0_53] : memref<8x8xf32, #tpu.memory_space<vmem>>, vector<8x8xf32>
    %331 = arith.truncf %329 : vector<8x32xf32> to vector<8x32xbf16>
    %c0_54 = arith.constant 0 : index
    %c0_55 = arith.constant 0 : index
    %332 = vector.load %arg7[%c0_54, %c0_55] : memref<32x128xbf16, #tpu.memory_space<vmem>>, vector<32x128xbf16>
    %cst_56 = arith.constant dense<0.000000e+00> : vector<8x128xf32>
    %333 = tpu.matmul %331, %332, %cst_56 {dimension_numbers = #tpu.dot_dimension_numbers<[1], [0], [0], [1], [0, 0, 1, 1], [], []>} : vector<8x32xbf16>, vector<32x128xbf16>, vector<8x128xf32> -> vector<8x128xf32>
    %cst_57 = arith.constant dense<0.000000e+00> : vector<8x128xf32>
    %334 = tpu.matmul %330, %333, %cst_57 {dimension_numbers = #tpu.dot_dimension_numbers<[1], [0], [0], [1], [0, 0, 1, 1], [], []>} : vector<8x8xf32>, vector<8x128xf32>, vector<8x128xf32> -> vector<8x128xf32>
    %c0_58 = arith.constant 0 : index
    %c0_59 = arith.constant 0 : index
    %335 = vector.load %arg8[%c0_58, %c0_59] : memref<1x128xf32, #tpu.memory_space<vmem>>, vector<1x128xf32>
    %336 = vector.broadcast %335 : vector<1x128xf32> to vector<8x128xf32>
    %337 = arith.addf %334, %336 : vector<8x128xf32>
    %cst_60 = arith.constant 0.000000e+00 : f32
    %338 = vector.broadcast %cst_60 : f32 to vector<8x128xf32>
    %339 = arith.maximumf %337, %338 : vector<8x128xf32>
    %340 = arith.truncf %339 : vector<8x128xf32> to vector<8x128xbf16>
    %c0_61 = arith.constant 0 : index
    %c0_62 = arith.constant 0 : index
    %341 = vector.load %arg9[%c0_61, %c0_62] : memref<128x128xbf16, #tpu.memory_space<vmem>>, vector<128x128xbf16>
    %cst_63 = arith.constant dense<0.000000e+00> : vector<8x128xf32>
    %342 = tpu.matmul %340, %341, %cst_63 {dimension_numbers = #tpu.dot_dimension_numbers<[1], [0], [0], [1], [0, 0, 1, 1], [], []>} : vector<8x128xbf16>, vector<128x128xbf16>, vector<8x128xf32> -> vector<8x128xf32>
    %cst_64 = arith.constant dense<0.000000e+00> : vector<8x128xf32>
    %343 = tpu.matmul %330, %342, %cst_64 {dimension_numbers = #tpu.dot_dimension_numbers<[1], [0], [0], [1], [0, 0, 1, 1], [], []>} : vector<8x8xf32>, vector<8x128xf32>, vector<8x128xf32> -> vector<8x128xf32>
    %c0_65 = arith.constant 0 : index
    %c0_66 = arith.constant 0 : index
    %344 = vector.load %arg10[%c0_65, %c0_66] : memref<1x128xf32, #tpu.memory_space<vmem>>, vector<1x128xf32>
    %345 = vector.broadcast %344 : vector<1x128xf32> to vector<8x128xf32>
    %346 = arith.addf %343, %345 : vector<8x128xf32>
    %347 = arith.truncf %346 : vector<8x128xf32> to vector<8x128xbf16>
    %c0_67 = arith.constant 0 : index
    %c0_68 = arith.constant 0 : index
    %348 = vector.load %arg11[%c0_67, %c0_68] : memref<128x128xbf16, #tpu.memory_space<vmem>>, vector<128x128xbf16>
    %cst_69 = arith.constant dense<0.000000e+00> : vector<8x128xf32>
    %349 = tpu.matmul %347, %348, %cst_69 {dimension_numbers = #tpu.dot_dimension_numbers<[1], [0], [0], [1], [0, 0, 1, 1], [], []>} : vector<8x128xbf16>, vector<128x128xbf16>, vector<8x128xf32> -> vector<8x128xf32>
    %c0_70 = arith.constant 0 : index
    %c0_71 = arith.constant 0 : index
    %350 = vector.load %arg12[%c0_70, %c0_71] : memref<1x128xf32, #tpu.memory_space<vmem>>, vector<1x128xf32>
    %351 = vector.broadcast %350 : vector<1x128xf32> to vector<8x128xf32>
    %352 = arith.addf %349, %351 : vector<8x128xf32>
    %cst_72 = arith.constant 0.000000e+00 : f32
    %353 = vector.broadcast %cst_72 : f32 to vector<8x128xf32>
    %354 = arith.maximumf %352, %353 : vector<8x128xf32>
    %355 = arith.truncf %354 : vector<8x128xf32> to vector<8x128xbf16>
    %c0_73 = arith.constant 0 : index
    %c0_74 = arith.constant 0 : index
    %356 = vector.load %arg13[%c0_73, %c0_74] : memref<128x128xbf16, #tpu.memory_space<vmem>>, vector<128x128xbf16>
    %cst_75 = arith.constant dense<0.000000e+00> : vector<8x128xf32>
    %357 = tpu.matmul %355, %356, %cst_75 {dimension_numbers = #tpu.dot_dimension_numbers<[1], [0], [0], [1], [0, 0, 1, 1], [], []>} : vector<8x128xbf16>, vector<128x128xbf16>, vector<8x128xf32> -> vector<8x128xf32>
    %c0_76 = arith.constant 0 : index
    %c0_77 = arith.constant 0 : index
    %358 = vector.load %arg14[%c0_76, %c0_77] : memref<1x128xf32, #tpu.memory_space<vmem>>, vector<1x128xf32>
    %359 = vector.broadcast %358 : vector<1x128xf32> to vector<8x128xf32>
    %360 = arith.addf %357, %359 : vector<8x128xf32>
    %c0_78 = arith.constant 0 : index
    %c0_79 = arith.constant 0 : index
    %361 = vector.load %arg15[%c0_78, %c0_79] : memref<8x128xf32, #tpu.memory_space<vmem>>, vector<8x128xf32>
    tpu.vector_store %arg15[%c0_78, %c0_79], %360 {strides = array<i32>} : memref<8x128xf32, #tpu.memory_space<vmem>>, vector<8x128xf32>,
    return
  }
}

</mosaic_0001>

<llo_original>
// kernel: lstm_gnn_forward.1
$region0: #{lstm_gnn_forward.1}
  #allocation0 [shape = 'u32[]', space=smem, size = 0x4, offset = 0x4, fixed_abs, tag = 'smem constant byte address 0x4 - core index']
  #allocation1 [shape = 'u32[72,128]{1,0:T(1,128)}', space=vmem, size = 0x9000, scoped, tag = 'internal scratch']
  %s0 = inlined_call_operand.vmem [shape: bf16[64,6], index: 0, kind: input, shape index: {}]
  %s1 = inlined_call_operand.hbm [shape: f32[8,8], index: 1, kind: input, shape index: {}]
  %s2 = inlined_call_operand.vmem [shape: bf16[6,128], index: 2, kind: input, shape index: {}]
  %s3 = inlined_call_operand.vmem [shape: bf16[32,128], index: 3, kind: input, shape index: {}]
  %s4 = inlined_call_operand.vmem [shape: bf16[32,128], index: 4, kind: input, shape index: {}]
  %s5 = inlined_call_operand.hbm [shape: bf16[32,128], index: 5, kind: input, shape index: {}]
  %s6 = inlined_call_operand.hbm [shape: f32[1,128], index: 6, kind: input, shape index: {}]
  %s7 = inlined_call_operand.hbm [shape: bf16[32,128], index: 7, kind: input, shape index: {}]
  %s8 = inlined_call_operand.hbm [shape: f32[1,128], index: 8, kind: input, shape index: {}]
  %s9 = inlined_call_operand.vmem [shape: bf16[128,128], index: 9, kind: input, shape index: {}]
  %s10 = inlined_call_operand.hbm [shape: f32[1,128], index: 10, kind: input, shape index: {}]
  %s11 = inlined_call_operand.vmem [shape: bf16[128,128], index: 11, kind: input, shape index: {}]
  %s12 = inlined_call_operand.hbm [shape: f32[1,128], index: 12, kind: input, shape index: {}]
  %s13 = inlined_call_operand.vmem [shape: bf16[128,128], index: 13, kind: input, shape index: {}]
  %s14 = inlined_call_operand.hbm [shape: f32[1,128], index: 14, kind: input, shape index: {}]
  %s15 = inlined_call_operand.vmem [shape: f32[8,128], index: 15, kind: output, shape index: {}]
  %s16 = sld [smem:[#allocation0]]
  $region102: #{lstm_gnn_forward.1} parent=0
    _
  %s18 = ssub.s32 1, %s16
  %s19 = scalar_select 0, %s18, %s16
  $region1: #{lstm_gnn_forward.1} parent=0
    #allocation2 [shape = 'u8[4096]{0}', space=vmem, size = 0x1000, scoped, tag = 'input window, operand 1, single buffered']
    #allocation3 [shape = 's32[1]{0}', space=sflag, size = 0x4, scoped, tag = 'scoped memory for lstm_gnn_forward.1']
    #allocation4 [shape = 'u8[8192]{0}', space=vmem, size = 0x2000, scoped, tag = 'input window, operand 5, single buffered']
    #allocation5 [shape = 's32[1]{0}', space=sflag, size = 0x4, scoped, tag = 'scoped memory for lstm_gnn_forward.1']
    #allocation6 [shape = 'u8[512]{0}', space=vmem, size = 0x400, scoped, tag = 'input window, operand 6, single buffered']
    #allocation7 [shape = 'u8[8192]{0}', space=vmem, size = 0x2000, scoped, tag = 'input window, operand 7, single buffered']
    #allocation8 [shape = 's32[1]{0}', space=sflag, size = 0x4, scoped, tag = 'scoped memory for lstm_gnn_forward.1']
    #allocation9 [shape = 'u8[512]{0}', space=vmem, size = 0x400, scoped, tag = 'input window, operand 8, single buffered']
    #allocation10 [shape = 'u8[512]{0}', space=vmem, size = 0x400, scoped, tag = 'input window, operand 10, single buffered']
    #allocation11 [shape = 's32[1]{0}', space=sflag, size = 0x4, scoped, tag = 'scoped memory for lstm_gnn_forward.1']
    #allocation12 [shape = 'u8[512]{0}', space=vmem, size = 0x400, scoped, tag = 'input window, operand 12, single buffered']
    #allocation13 [shape = 'u8[512]{0}', space=vmem, size = 0x400, scoped, tag = 'input window, operand 14, single buffered']
    #allocation14 [shape = 's32[1]{0}', space=sflag, size = 0x4, scoped, tag = 'scoped memory for lstm_gnn_forward.1']
    %20 = vsyncpa [#allocation3], 0
    %21 = vsyncpa [#allocation5], 0
    %22 = vsyncpa [#allocation8], 0
    %23 = vsyncpa [#allocation11], 0
    %24 = vsyncpa [#allocation14], 0
    // Predicated region
    $region2: #{lstm_gnn_forward.1} parent=1 // pred_check
      _
    $region3: #{lstm_gnn_forward.1} parent=1 // pred_check_branch
      %26 = sbr.rel (0) target = $region5
    $region4: #{lstm_gnn_forward.1} parent=1 // pred_region
      _
    $region5: #{lstm_gnn_forward.1} parent=1 // pred_fallthru
      _
    // Predicated region
    $region6: #{lstm_gnn_forward.1} parent=1 // pred_check
      _
    $region7: #{lstm_gnn_forward.1} parent=1 // pred_check_branch
      %28 = sbr.rel (0) target = $region9
    $region8: #{lstm_gnn_forward.1} parent=1 // pred_region
      %30 = vsyncadd [#allocation3], 0
      %s32 = sshll.u32 %s1, 4
      %s33 = int_to_ptr.hbm [resolvable:$true] %s32
      %s34 = sshll.u32 [#allocation2], 4
      %s35 = int_to_ptr.vmem [resolvable:$true] %s34
      %37 = dma.hbm_to_vmem [thread:$0]  %s33, 128, %s35, [#allocation3]
    $region9: #{lstm_gnn_forward.1} parent=1 // pred_fallthru
      _
    // Predicated region
    $region10: #{lstm_gnn_forward.1} parent=1 // pred_check
      _
    $region11: #{lstm_gnn_forward.1} parent=1 // pred_check_branch
      %39 = sbr.rel (0) target = $region13
    $region12: #{lstm_gnn_forward.1} parent=1 // pred_region
      _
    $region13: #{lstm_gnn_forward.1} parent=1 // pred_fallthru
      _
    // Predicated region
    $region14: #{lstm_gnn_forward.1} parent=1 // pred_check
      _
    $region15: #{lstm_gnn_forward.1} parent=1 // pred_check_branch
      %41 = sbr.rel (0) target = $region17
    $region16: #{lstm_gnn_forward.1} parent=1 // pred_region
      _
    $region17: #{lstm_gnn_forward.1} parent=1 // pred_fallthru
      _
    // Predicated region
    $region18: #{lstm_gnn_forward.1} parent=1 // pred_check
      _
    $region19: #{lstm_gnn_forward.1} parent=1 // pred_check_branch
      %43 = sbr.rel (0) target = $region21
    $region20: #{lstm_gnn_forward.1} parent=1 // pred_region
      _
    $region21: #{lstm_gnn_forward.1} parent=1 // pred_fallthru
      _
    // Predicated region
    $region22: #{lstm_gnn_forward.1} parent=1 // pred_check
      _
    $region23: #{lstm_gnn_forward.1} parent=1 // pred_check_branch
      %45 = sbr.rel (0) target = $region25
    $region24: #{lstm_gnn_forward.1} parent=1 // pred_region
      %47 = vsyncadd [#allocation5], 0
      %s48 = sshll.u32 %s5, 4
      %s49 = int_to_ptr.hbm [resolvable:$true] %s48
      %s50 = sshll.u32 [#allocation4], 4
      %s51 = int_to_ptr.vmem [resolvable:$true] %s50
      %56 = dma.hbm_to_vmem [thread:$0]  %s49, 256, %s51, [#allocation5], 64, 64, 4
    $region25: #{lstm_gnn_forward.1} parent=1 // pred_fallthru
      _
    // Predicated region
    $region26: #{lstm_gnn_forward.1} parent=1 // pred_check
      _
    $region27: #{lstm_gnn_forward.1} parent=1 // pred_check_branch
      %58 = sbr.rel (0) target = $region29
    $region28: #{lstm_gnn_forward.1} parent=1 // pred_region
      %60 = vsyncadd [#allocation5], 0
      %s62 = sshll.u32 %s6, 4
      %s63 = int_to_ptr.hbm [resolvable:$true] %s62
      %s64 = sshll.u32 [#allocation6], 4
      %s65 = int_to_ptr.vmem [resolvable:$true] %s64
      %67 = dma.hbm_to_vmem [thread:$0]  %s63, 16, %s65, [#allocation5]
    $region29: #{lstm_gnn_forward.1} parent=1 // pred_fallthru
      _
    // Predicated region
    $region30: #{lstm_gnn_forward.1} parent=1 // pred_check
      _
    $region31: #{lstm_gnn_forward.1} parent=1 // pred_check_branch
      %69 = sbr.rel (0) target = $region33
    $region32: #{lstm_gnn_forward.1} parent=1 // pred_region
      %71 = vsyncadd [#allocation8], 0
      %s72 = sshll.u32 %s7, 4
      %s73 = int_to_ptr.hbm [resolvable:$true] %s72
      %s74 = sshll.u32 [#allocation7], 4
      %s75 = int_to_ptr.vmem [resolvable:$true] %s74
      %80 = dma.hbm_to_vmem [thread:$0]  %s73, 256, %s75, [#allocation8], 64, 64, 4
    $region33: #{lstm_gnn_forward.1} parent=1 // pred_fallthru
      _
    // Predicated region
    $region34: #{lstm_gnn_forward.1} parent=1 // pred_check
      _
    $region35: #{lstm_gnn_forward.1} parent=1 // pred_check_branch
      %82 = sbr.rel (0) target = $region37
    $region36: #{lstm_gnn_forward.1} parent=1 // pred_region
      %84 = vsyncadd [#allocation8], 0
      %s86 = sshll.u32 %s8, 4
      %s87 = int_to_ptr.hbm [resolvable:$true] %s86
      %s88 = sshll.u32 [#allocation9], 4
      %s89 = int_to_ptr.vmem [resolvable:$true] %s88
      %91 = dma.hbm_to_vmem [thread:$0]  %s87, 16, %s89, [#allocation8]
    $region37: #{lstm_gnn_forward.1} parent=1 // pred_fallthru
      _
    // Predicated region
    $region38: #{lstm_gnn_forward.1} parent=1 // pred_check
      _
    $region39: #{lstm_gnn_forward.1} parent=1 // pred_check_branch
      %93 = sbr.rel (0) target = $region41
    $region40: #{lstm_gnn_forward.1} parent=1 // pred_region
      _
    $region41: #{lstm_gnn_forward.1} parent=1 // pred_fallthru
      _
    // Predicated region
    $region42: #{lstm_gnn_forward.1} parent=1 // pred_check
      _
    $region43: #{lstm_gnn_forward.1} parent=1 // pred_check_branch
      %95 = sbr.rel (0) target = $region45
    $region44: #{lstm_gnn_forward.1} parent=1 // pred_region
      %97 = vsyncadd [#allocation11], 0
      %s99 = sshll.u32 %s10, 4
      %s100 = int_to_ptr.hbm [resolvable:$true] %s99
      %s101 = sshll.u32 [#allocation10], 4
      %s102 = int_to_ptr.vmem [resolvable:$true] %s101
      %104 = dma.hbm_to_vmem [thread:$0]  %s100, 16, %s102, [#allocation11]
    $region45: #{lstm_gnn_forward.1} parent=1 // pred_fallthru
      _
    // Predicated region
    $region46: #{lstm_gnn_forward.1} parent=1 // pred_check
      _
    $region47: #{lstm_gnn_forward.1} parent=1 // pred_check_branch
      %106 = sbr.rel (0) target = $region49
    $region48: #{lstm_gnn_forward.1} parent=1 // pred_region
      _
    $region49: #{lstm_gnn_forward.1} parent=1 // pred_fallthru
      _
    // Predicated region
    $region50: #{lstm_gnn_forward.1} parent=1 // pred_check
      _
    $region51: #{lstm_gnn_forward.1} parent=1 // pred_check_branch
      %108 = sbr.rel (0) target = $region53
    $region52: #{lstm_gnn_forward.1} parent=1 // pred_region
      %110 = vsyncadd [#allocation11], 0
      %s112 = sshll.u32 %s12, 4
      %s113 = int_to_ptr.hbm [resolvable:$true] %s112
      %s114 = sshll.u32 [#allocation12], 4
      %s115 = int_to_ptr.vmem [resolvable:$true] %s114
      %117 = dma.hbm_to_vmem [thread:$0]  %s113, 16, %s115, [#allocation11]
    $region53: #{lstm_gnn_forward.1} parent=1 // pred_fallthru
      _
    // Predicated region
    $region54: #{lstm_gnn_forward.1} parent=1 // pred_check
      _
    $region55: #{lstm_gnn_forward.1} parent=1 // pred_check_branch
      %119 = sbr.rel (0) target = $region57
    $region56: #{lstm_gnn_forward.1} parent=1 // pred_region
      _
    $region57: #{lstm_gnn_forward.1} parent=1 // pred_fallthru
      _
    // Predicated region
    $region58: #{lstm_gnn_forward.1} parent=1 // pred_check
      _
    $region59: #{lstm_gnn_forward.1} parent=1 // pred_check_branch
      %121 = sbr.rel (0) target = $region61
    $region60: #{lstm_gnn_forward.1} parent=1 // pred_region
      %123 = vsyncadd [#allocation14], 0
      %s125 = sshll.u32 %s14, 4
      %s126 = int_to_ptr.hbm [resolvable:$true] %s125
      %s127 = sshll.u32 [#allocation13], 4
      %s128 = int_to_ptr.vmem [resolvable:$true] %s127
      %130 = dma.hbm_to_vmem [thread:$0]  %s126, 16, %s128, [#allocation14]
    $region61: #{lstm_gnn_forward.1} parent=1 // pred_fallthru
      _
    // Predicated region
    $region62: #{lstm_gnn_forward.1} parent=1 // pred_check
      _
    $region63: #{lstm_gnn_forward.1} parent=1 // pred_check_branch
      %132 = sbr.rel (0) target = $region65
    $region64: #{lstm_gnn_forward.1} parent=1 // pred_region
      %134 = dma.done [#allocation3], 128
    $region65: #{lstm_gnn_forward.1} parent=1 // pred_fallthru
      _
    // Predicated region
    $region66: #{lstm_gnn_forward.1} parent=1 // pred_check
      _
    $region67: #{lstm_gnn_forward.1} parent=1 // pred_check_branch
      %136 = sbr.rel (0) target = $region69
    $region68: #{lstm_gnn_forward.1} parent=1 // pred_region
      %138 = dma.done [#allocation5], 256
    $region69: #{lstm_gnn_forward.1} parent=1 // pred_fallthru
      _
    // Predicated region
    $region70: #{lstm_gnn_forward.1} parent=1 // pred_check
      _
    $region71: #{lstm_gnn_forward.1} parent=1 // pred_check_branch
      %140 = sbr.rel (0) target = $region73
    $region72: #{lstm_gnn_forward.1} parent=1 // pred_region
      %142 = dma.done [#allocation5], 16
    $region73: #{lstm_gnn_forward.1} parent=1 // pred_fallthru
      _
    // Predicated region
    $region74: #{lstm_gnn_forward.1} parent=1 // pred_check
      _
    $region75: #{lstm_gnn_forward.1} parent=1 // pred_check_branch
      %144 = sbr.rel (0) target = $region77
    $region76: #{lstm_gnn_forward.1} parent=1 // pred_region
      %146 = dma.done [#allocation8], 256
    $region77: #{lstm_gnn_forward.1} parent=1 // pred_fallthru
      _
    // Predicated region
    $region78: #{lstm_gnn_forward.1} parent=1 // pred_check
      _
    $region79: #{lstm_gnn_forward.1} parent=1 // pred_check_branch
      %148 = sbr.rel (0) target = $region81
    $region80: #{lstm_gnn_forward.1} parent=1 // pred_region
      %150 = dma.done [#allocation8], 16
    $region81: #{lstm_gnn_forward.1} parent=1 // pred_fallthru
      _
    // Predicated region
    $region82: #{lstm_gnn_forward.1} parent=1 // pred_check
      _
    $region83: #{lstm_gnn_forward.1} parent=1 // pred_check_branch
      %152 = sbr.rel (0) target = $region85
    $region84: #{lstm_gnn_forward.1} parent=1 // pred_region
      %154 = dma.done [#allocation11], 16
    $region85: #{lstm_gnn_forward.1} parent=1 // pred_fallthru
      _
    // Predicated region
    $region86: #{lstm_gnn_forward.1} parent=1 // pred_check
      _
    $region87: #{lstm_gnn_forward.1} parent=1 // pred_check_branch
      %156 = sbr.rel (0) target = $region89
    $region88: #{lstm_gnn_forward.1} parent=1 // pred_region
      %158 = dma.done [#allocation11], 16
    $region89: #{lstm_gnn_forward.1} parent=1 // pred_fallthru
      _
    // Predicated region
    $region90: #{lstm_gnn_forward.1} parent=1 // pred_check
      _
    $region91: #{lstm_gnn_forward.1} parent=1 // pred_check_branch
      %160 = sbr.rel (0) target = $region93
    $region92: #{lstm_gnn_forward.1} parent=1 // pred_region
      %162 = dma.done [#allocation14], 16
    $region93: #{lstm_gnn_forward.1} parent=1 // pred_fallthru
      _
    %v164 = vld [vmem:[%s0] sm:$0xf]
    %v165 = vld [vmem:[%s0 + $0x4] sm:$0xf]
    %v166 = vld [vmem:[%s0 + $0x8] sm:$0xf]
    %v167 = vld [vmem:[%s0 + $0xc] sm:$0xf]
    %v168 = vld [vmem:[%s0 + $0x10] sm:$0xf]
    %v169 = vld [vmem:[%s0 + $0x14] sm:$0xf]
    %v170 = vld [vmem:[%s0 + $0x18] sm:$0xf]
    %v171 = vld [vmem:[%s0 + $0x1c] sm:$0xf]
    %v172 = vld [vmem:[%s2] sm:$0x7]
    %v181 = vunpack.c.l.b16 %v164
    %v182 = vunpack.c.l.b16 %v165
    %v183 = vunpack.c.l.b16 %v166
    %v184 = vunpack.c.l.b16 %v167
    %v185 = vunpack.c.l.b16 %v168
    %v186 = vunpack.c.l.b16 %v169
    %v187 = vunpack.c.l.b16 %v170
    %v188 = vunpack.c.l.b16 %v171
    %v189 = vpack.c.b16 %v182, %v181
    %v190 = vpack.c.b16 %v184, %v183
    %v191 = vpack.c.b16 %v186, %v185
    %v192 = vpack.c.b16 %v188, %v187
    %vm193 = vcmask 48128
    %v195 = vsel %vm193, %v189, 0
    %v198 = vsel %vm193, %v190, 0
    %v201 = vsel %vm193, %v191, 0
    %v204 = vsel %vm193, %v192, 0
    %vm206 = vcmask 1042432
    %v208 = vsel %vm206, %v172, 0
    %210 = vmatpush.bf16.msra.mxu0 0
    %211 = vmatpush.bf16.msra.mxu0 0
    %212 = vmatpush.bf16.msra.mxu0 0
    %213 = vmatpush.bf16.msra.mxu0 0
    %214 = vmatpush.bf16.msra.mxu0 0
    %215 = vmatpush.bf16.msra.mxu0 0
    %216 = vmatpush.bf16.msra.mxu0 0
    %217 = vmatpush.bf16.msra.mxu0 %v208
    %218 = vmatmul.bf16.gmra.mxu0 %v195
    %v219 = vpop.f32.mrf.mxu0
    %v220 = vadd.f32 0.0, %v219
    %v221 = vpop.f32.mrf.mxu0
    %v222 = vadd.f32 0.0, %v221
    %223 = vmatmul.bf16.gmra.mxu0 %v198
    %v224 = vpop.f32.mrf.mxu0
    %v225 = vadd.f32 0.0, %v224
    %v226 = vpop.f32.mrf.mxu0
    %v227 = vadd.f32 0.0, %v226
    %228 = vmatmul.bf16.gmra.mxu0 %v201
    %v229 = vpop.f32.mrf.mxu0
    %v230 = vadd.f32 0.0, %v229
    %v231 = vpop.f32.mrf.mxu0
    %v232 = vadd.f32 0.0, %v231
    %233 = vmatmul.bf16.gmra.mxu0 %v204
    %v234 = vpop.f32.mrf.mxu0
    %v235 = vadd.f32 0.0, %v234
    %v236 = vpop.f32.mrf.mxu0
    %v237 = vadd.f32 0.0, %v236
    %238 = vdwg.mxu0
    %v239 = vld [vmem:[%s3] sm:$0xf]
    %v240 = vld [vmem:[%s3 + $0x4] sm:$0xf]
    %v241 = vld [vmem:[%s3 + $0x8] sm:$0xf]
    %v242 = vld [vmem:[%s3 + $0xc] sm:$0xf]
    %v243 = vld [vmem:[%s4] sm:$0xf]
    %v244 = vld [vmem:[%s4 + $0x4] sm:$0xf]
    %v245 = vld [vmem:[%s4 + $0x8] sm:$0xf]
    %v246 = vld [vmem:[%s4 + $0xc] sm:$0xf]
    %v247 = vld [vmem:[#allocation4] sm:$0xf]
    %v248 = vld [vmem:[#allocation4 + $0x4] sm:$0xf]
    %v249 = vld [vmem:[#allocation4 + $0x8] sm:$0xf]
    %v250 = vld [vmem:[#allocation4 + $0xc] sm:$0xf]
    %v251 = vld [vmem:[#allocation6] sm:$0x1]
    %v253 = vperm.slane %v251, 0
    %v259 = vunpack.c.l.b16 %v239
    %v260 = vunpack.c.l.b16 %v240
    %v261 = vunpack.c.l.b16 %v241
    %v262 = vunpack.c.l.b16 %v242
    %v263 = vpack.c.b16 %v260, %v259
    %v264 = vpack.c.b16 %v262, %v261
    %vm267 = vcmask 261120
    %v269 = vsel %vm267, 0, 0
    %271 = vmatpush.bf16.msra.mxu0 0
    %272 = vmatpush.bf16.msra.mxu0 0
    %273 = vmatpush.bf16.msra.mxu0 0
    %274 = vmatpush.bf16.msra.mxu0 0
    %275 = vmatpush.bf16.msra.mxu0 0
    %276 = vmatpush.bf16.msra.mxu0 0
    %277 = vmatpush.bf16.msra.mxu0 %v264
    %278 = vmatpush.bf16.msra.mxu0 %v263
    %279 = vmatmul.bf16.gmra.mxu0 %v269
    %v280 = vpop.f32.mrf.mxu0
    %v281 = vadd.f32 0.0, %v280
    %v282 = vpop.f32.mrf.mxu0
    %283 = vdwg.mxu0
    %v284 = vadd.f32 %v220, %v281
    %v285 = vxor.u32 %v284, 2147483648
    %v286 = vmul.f32 %v285, 1.442695
    %v287 = vpow.pop %v286
    %v288 = vadd.f32 %v287, 1.0
    %v289 = vrcp.pop %v288
    %v290 = vmul.f32 %v288, %v289
    %v291 = vsub.f32 1.0, %v290
    %v292 = vmul.f32 %v289, %v291
    %v293 = vadd.f32 %v289, %v292
    %vm294 = vweird.f32 %v288
    %vm295 = vweird.f32 %v289
    %vm296 = vmor %vm294, %vm295
    %v297 = vsel %vm296, %v289, %v293
    %v298 = vand.u32 2147483647, %v288
    %vm299 = vcmp.eq.f32.partialorder %v298, 8.507059e+37
    %v300 = vand.u32 %v288, 2147483648
    %v301 = vor.u32 1.1754944e-38, %v300
    %v302 = vsel %vm299, %v301, %v297
    %v303 = vmul.f32 1.0, %v302
    %v304 = vtanh.pop %v284
    %v305 = vmul.f32 %v303, 0.0
    %307 = vrot.lane.b32.xlu0 %v304, 64
    %v308 = vpop.permute.xlu0 %307
    %v310 = vmul.f32 %v303, %v308
    %312 = vrot.lane.b32.xlu0 %v310, 32
    %v313 = vpop.permute.xlu0 %312
    %v315 = vadd.f32 %v305, %v313
    %v316 = vtanh.pop %v315
    %318 = vrot.lane.b32.xlu0 %v316, 64
    %v319 = vpop.permute.xlu0 %318
    %v321 = vmul.f32 %v303, %v319
    %v322 = vpack.c.bf16 %v321, %v321
    %324 = vrot.lane.b32.xlu0 %v322, 32
    %v325 = vpop.permute.xlu0 %324
    %v330 = vunpack.c.l.b16 %v243
    %v331 = vunpack.c.l.b16 %v244
    %v332 = vunpack.c.l.b16 %v245
    %v333 = vunpack.c.l.b16 %v246
    %v334 = vpack.c.b16 %v331, %v330
    %v335 = vpack.c.b16 %v333, %v332
    %v339 = vsel %vm267, %v325, 0
    %341 = vmatpush.bf16.msra.mxu0 0
    %342 = vmatpush.bf16.msra.mxu0 0
    %343 = vmatpush.bf16.msra.mxu0 0
    %344 = vmatpush.bf16.msra.mxu0 0
    %345 = vmatpush.bf16.msra.mxu0 0
    %346 = vmatpush.bf16.msra.mxu0 0
    %347 = vmatpush.bf16.msra.mxu0 %v335
    %348 = vmatpush.bf16.msra.mxu0 %v334
    %349 = vmatmul.bf16.gmra.mxu0 %v339
    %v350 = vpop.f32.mrf.mxu0
    %v351 = vadd.f32 0.0, %v350
    %v352 = vpop.f32.mrf.mxu0
    %353 = vdwg.mxu0
    %v358 = vunpack.c.l.b16 %v247
    %v359 = vunpack.c.l.b16 %v248
    %v360 = vunpack.c.l.b16 %v249
    %v361 = vunpack.c.l.b16 %v250
    %v362 = vpack.c.b16 %v359, %v358
    %v363 = vpack.c.b16 %v361, %v360
    %366 = vmatpush.bf16.msra.mxu0 0
    %367 = vmatpush.bf16.msra.mxu0 0
    %368 = vmatpush.bf16.msra.mxu0 0
    %369 = vmatpush.bf16.msra.mxu0 0
    %370 = vmatpush.bf16.msra.mxu0 0
    %371 = vmatpush.bf16.msra.mxu0 0
    %372 = vmatpush.bf16.msra.mxu0 %v363
    %373 = vmatpush.bf16.msra.mxu0 %v362
    %374 = vmatmul.bf16.gmra.mxu0 %v269
    %v375 = vpop.f32.mrf.mxu0
    %v376 = vadd.f32 %v351, %v375
    %v377 = vpop.f32.mrf.mxu0
    %378 = vdwg.mxu0
    %v379 = vadd.f32 %v376, %v253
    %v380 = vxor.u32 %v379, 2147483648
    %v381 = vmul.f32 %v380, 1.442695
    %v382 = vpow.pop %v381
    %v383 = vadd.f32 %v382, 1.0
    %v384 = vrcp.pop %v383
    %v385 = vmul.f32 %v383, %v384
    %v386 = vsub.f32 1.0, %v385
    %v387 = vmul.f32 %v384, %v386
    %v388 = vadd.f32 %v384, %v387
    %vm389 = vweird.f32 %v383
    %vm390 = vweird.f32 %v384
    %vm391 = vmor %vm389, %vm390
    %v392 = vsel %vm391, %v384, %v388
    %v393 = vand.u32 2147483647, %v383
    %vm394 = vcmp.eq.f32.partialorder %v393, 8.507059e+37
    %v395 = vand.u32 %v383, 2147483648
    %v396 = vor.u32 1.1754944e-38, %v395
    %v397 = vsel %vm394, %v396, %v392
    %v398 = vmul.f32 1.0, %v397
    %v399 = vtanh.pop %v379
    %v400 = vmul.f32 %v398, 0.0
    %402 = vrot.lane.b32.xlu0 %v399, 64
    %v403 = vpop.permute.xlu0 %402
    %v405 = vmul.f32 %v398, %v403
    %407 = vrot.lane.b32.xlu0 %v405, 32
    %v408 = vpop.permute.xlu0 %407
    %v410 = vadd.f32 %v400, %v408
    %v411 = vtanh.pop %v410
    %413 = vrot.lane.b32.xlu0 %v411, 64
    %v414 = vpop.permute.xlu0 %413
    %v416 = vmul.f32 %v398, %v414
    %417 = vmatpush.bf16.msra.mxu0 0
    %418 = vmatpush.bf16.msra.mxu0 0
    %419 = vmatpush.bf16.msra.mxu0 0
    %420 = vmatpush.bf16.msra.mxu0 0
    %421 = vmatpush.bf16.msra.mxu0 0
    %422 = vmatpush.bf16.msra.mxu0 0
    %423 = vmatpush.bf16.msra.mxu0 %v264
    %424 = vmatpush.bf16.msra.mxu0 %v263
    %425 = vmatmul.bf16.gmra.mxu0 %v339
    %v426 = vpop.f32.mrf.mxu0
    %v427 = vadd.f32 0.0, %v426
    %v428 = vpop.f32.mrf.mxu0
    %429 = vdwg.mxu0
    %v430 = vadd.f32 %v222, %v427
    %v431 = vxor.u32 %v430, 2147483648
    %v432 = vmul.f32 %v431, 1.442695
    %v433 = vpow.pop %v432
    %v434 = vadd.f32 %v433, 1.0
    %v435 = vrcp.pop %v434
    %v436 = vmul.f32 %v434, %v435
    %v437 = vsub.f32 1.0, %v436
    %v438 = vmul.f32 %v435, %v437
    %v439 = vadd.f32 %v435, %v438
    %vm440 = vweird.f32 %v434
    %vm441 = vweird.f32 %v435
    %vm442 = vmor %vm440, %vm441
    %v443 = vsel %vm442, %v435, %v439
    %v444 = vand.u32 2147483647, %v434
    %vm445 = vcmp.eq.f32.partialorder %v444, 8.507059e+37
    %v446 = vand.u32 %v434, 2147483648
    %v447 = vor.u32 1.1754944e-38, %v446
    %v448 = vsel %vm445, %v447, %v443
    %v449 = vmul.f32 1.0, %v448
    %v450 = vtanh.pop %v430
    %v451 = vmul.f32 %v449, %v315
    %453 = vrot.lane.b32.xlu0 %v450, 64
    %v454 = vpop.permute.xlu0 %453
    %v456 = vmul.f32 %v449, %v454
    %458 = vrot.lane.b32.xlu0 %v456, 32
    %v459 = vpop.permute.xlu0 %458
    %v461 = vadd.f32 %v451, %v459
    %v462 = vtanh.pop %v461
    %464 = vrot.lane.b32.xlu0 %v462, 64
    %v465 = vpop.permute.xlu0 %464
    %v467 = vmul.f32 %v449, %v465
    %v468 = vpack.c.bf16 %v416, %v416
    %v469 = vpack.c.bf16 %v467, %v467
    %471 = vrot.lane.b32.xlu0 %v469, 32
    %v472 = vpop.permute.xlu0 %471
    %v474 = vsel %vm267, %v472, 0
    %476 = vmatpush.bf16.msra.mxu0 0
    %477 = vmatpush.bf16.msra.mxu0 0
    %478 = vmatpush.bf16.msra.mxu0 0
    %479 = vmatpush.bf16.msra.mxu0 0
    %480 = vmatpush.bf16.msra.mxu0 0
    %481 = vmatpush.bf16.msra.mxu0 0
    %482 = vmatpush.bf16.msra.mxu0 %v335
    %483 = vmatpush.bf16.msra.mxu0 %v334
    %484 = vmatmul.bf16.gmra.mxu0 %v474
    %v485 = vpop.f32.mrf.mxu0
    %v486 = vadd.f32 0.0, %v485
    %v487 = vpop.f32.mrf.mxu0
    %488 = vdwg.mxu0
    %490 = vrot.lane.b32.xlu0 %v468, 32
    %v491 = vpop.permute.xlu0 %490
    %v493 = vsel %vm267, %v491, 0
    %495 = vmatpush.bf16.msra.mxu0 0
    %496 = vmatpush.bf16.msra.mxu0 0
    %497 = vmatpush.bf16.msra.mxu0 0
    %498 = vmatpush.bf16.msra.mxu0 0
    %499 = vmatpush.bf16.msra.mxu0 0
    %500 = vmatpush.bf16.msra.mxu0 0
    %501 = vmatpush.bf16.msra.mxu0 %v363
    %502 = vmatpush.bf16.msra.mxu0 %v362
    %503 = vmatmul.bf16.gmra.mxu0 %v493
    %v504 = vpop.f32.mrf.mxu0
    %v505 = vadd.f32 %v486, %v504
    %v506 = vpop.f32.mrf.mxu0
    %507 = vdwg.mxu0
    %v508 = vadd.f32 %v505, %v253
    %v509 = vxor.u32 %v508, 2147483648
    %v510 = vmul.f32 %v509, 1.442695
    %v511 = vpow.pop %v510
    %v512 = vadd.f32 %v511, 1.0
    %v513 = vrcp.pop %v512
    %v514 = vmul.f32 %v512, %v513
    %v515 = vsub.f32 1.0, %v514
    %v516 = vmul.f32 %v513, %v515
    %v517 = vadd.f32 %v513, %v516
    %vm518 = vweird.f32 %v512
    %vm519 = vweird.f32 %v513
    %vm520 = vmor %vm518, %vm519
    %v521 = vsel %vm520, %v513, %v517
    %v522 = vand.u32 2147483647, %v512
    %vm523 = vcmp.eq.f32.partialorder %v522, 8.507059e+37
    %v524 = vand.u32 %v512, 2147483648
    %v525 = vor.u32 1.1754944e-38, %v524
    %v526 = vsel %vm523, %v525, %v521
    %v527 = vmul.f32 1.0, %v526
    %v528 = vtanh.pop %v508
    %v529 = vmul.f32 %v527, %v410
    %531 = vrot.lane.b32.xlu0 %v528, 64
    %v532 = vpop.permute.xlu0 %531
    %v534 = vmul.f32 %v527, %v532
    %536 = vrot.lane.b32.xlu0 %v534, 32
    %v537 = vpop.permute.xlu0 %536
    %v539 = vadd.f32 %v529, %v537
    %v540 = vtanh.pop %v539
    %542 = vrot.lane.b32.xlu0 %v540, 64
    %v543 = vpop.permute.xlu0 %542
    %v545 = vmul.f32 %v527, %v543
    %546 = vmatpush.bf16.msra.mxu0 0
    %547 = vmatpush.bf16.msra.mxu0 0
    %548 = vmatpush.bf16.msra.mxu0 0
    %549 = vmatpush.bf16.msra.mxu0 0
    %550 = vmatpush.bf16.msra.mxu0 0
    %551 = vmatpush.bf16.msra.mxu0 0
    %552 = vmatpush.bf16.msra.mxu0 %v264
    %553 = vmatpush.bf16.msra.mxu0 %v263
    %554 = vmatmul.bf16.gmra.mxu0 %v474
    %v555 = vpop.f32.mrf.mxu0
    %v556 = vadd.f32 0.0, %v555
    %v557 = vpop.f32.mrf.mxu0
    %558 = vdwg.mxu0
    %v559 = vadd.f32 %v225, %v556
    %v560 = vxor.u32 %v559, 2147483648
    %v561 = vmul.f32 %v560, 1.442695
    %v562 = vpow.pop %v561
    %v563 = vadd.f32 %v562, 1.0
    %v564 = vrcp.pop %v563
    %v565 = vmul.f32 %v563, %v564
    %v566 = vsub.f32 1.0, %v565
    %v567 = vmul.f32 %v564, %v566
    %v568 = vadd.f32 %v564, %v567
    %vm569 = vweird.f32 %v563
    %vm570 = vweird.f32 %v564
    %vm571 = vmor %vm569, %vm570
    %v572 = vsel %vm571, %v564, %v568
    %v573 = vand.u32 2147483647, %v563
    %vm574 = vcmp.eq.f32.partialorder %v573, 8.507059e+37
    %v575 = vand.u32 %v563, 2147483648
    %v576 = vor.u32 1.1754944e-38, %v575
    %v577 = vsel %vm574, %v576, %v572
    %v578 = vmul.f32 1.0, %v577
    %v579 = vtanh.pop %v559
    %v580 = vmul.f32 %v578, %v461
    %582 = vrot.lane.b32.xlu0 %v579, 64
    %v583 = vpop.permute.xlu0 %582
    %v585 = vmul.f32 %v578, %v583
    %587 = vrot.lane.b32.xlu0 %v585, 32
    %v588 = vpop.permute.xlu0 %587
    %v590 = vadd.f32 %v580, %v588
    %v591 = vtanh.pop %v590
    %593 = vrot.lane.b32.xlu0 %v591, 64
    %v594 = vpop.permute.xlu0 %593
    %v596 = vmul.f32 %v578, %v594
    %v597 = vpack.c.bf16 %v545, %v545
    %v598 = vpack.c.bf16 %v596, %v596
    %600 = vrot.lane.b32.xlu0 %v598, 32
    %v601 = vpop.permute.xlu0 %600
    %v603 = vsel %vm267, %v601, 0
    %605 = vmatpush.bf16.msra.mxu0 0
    %606 = vmatpush.bf16.msra.mxu0 0
    %607 = vmatpush.bf16.msra.mxu0 0
    %608 = vmatpush.bf16.msra.mxu0 0
    %609 = vmatpush.bf16.msra.mxu0 0
    %610 = vmatpush.bf16.msra.mxu0 0
    %611 = vmatpush.bf16.msra.mxu0 %v335
    %612 = vmatpush.bf16.msra.mxu0 %v334
    %613 = vmatmul.bf16.gmra.mxu0 %v603
    %v614 = vpop.f32.mrf.mxu0
    %v615 = vadd.f32 0.0, %v614
    %v616 = vpop.f32.mrf.mxu0
    %617 = vdwg.mxu0
    %619 = vrot.lane.b32.xlu0 %v597, 32
    %v620 = vpop.permute.xlu0 %619
    %v622 = vsel %vm267, %v620, 0
    %624 = vmatpush.bf16.msra.mxu0 0
    %625 = vmatpush.bf16.msra.mxu0 0
    %626 = vmatpush.bf16.msra.mxu0 0
    %627 = vmatpush.bf16.msra.mxu0 0
    %628 = vmatpush.bf16.msra.mxu0 0
    %629 = vmatpush.bf16.msra.mxu0 0
    %630 = vmatpush.bf16.msra.mxu0 %v363
    %631 = vmatpush.bf16.msra.mxu0 %v362
    %632 = vmatmul.bf16.gmra.mxu0 %v622
    %v633 = vpop.f32.mrf.mxu0
    %v634 = vadd.f32 %v615, %v633
    %v635 = vpop.f32.mrf.mxu0
    %636 = vdwg.mxu0
    %v637 = vadd.f32 %v634, %v253
    %v638 = vxor.u32 %v637, 2147483648
    %v639 = vmul.f32 %v638, 1.442695
    %v640 = vpow.pop %v639
    %v641 = vadd.f32 %v640, 1.0
    %v642 = vrcp.pop %v641
    %v643 = vmul.f32 %v641, %v642
    %v644 = vsub.f32 1.0, %v643
    %v645 = vmul.f32 %v642, %v644
    %v646 = vadd.f32 %v642, %v645
    %vm647 = vweird.f32 %v641
    %vm648 = vweird.f32 %v642
    %vm649 = vmor %vm647, %vm648
    %v650 = vsel %vm649, %v642, %v646
    %v651 = vand.u32 2147483647, %v641
    %vm652 = vcmp.eq.f32.partialorder %v651, 8.507059e+37
    %v653 = vand.u32 %v641, 2147483648
    %v654 = vor.u32 1.1754944e-38, %v653
    %v655 = vsel %vm652, %v654, %v650
    %v656 = vmul.f32 1.0, %v655
    %v657 = vtanh.pop %v637
    %v658 = vmul.f32 %v656, %v539
    %660 = vrot.lane.b32.xlu0 %v657, 64
    %v661 = vpop.permute.xlu0 %660
    %v663 = vmul.f32 %v656, %v661
    %665 = vrot.lane.b32.xlu0 %v663, 32
    %v666 = vpop.permute.xlu0 %665
    %v668 = vadd.f32 %v658, %v666
    %v669 = vtanh.pop %v668
    %671 = vrot.lane.b32.xlu0 %v669, 64
    %v672 = vpop.permute.xlu0 %671
    %v674 = vmul.f32 %v656, %v672
    %675 = vmatpush.bf16.msra.mxu0 0
    %676 = vmatpush.bf16.msra.mxu0 0
    %677 = vmatpush.bf16.msra.mxu0 0
    %678 = vmatpush.bf16.msra.mxu0 0
    %679 = vmatpush.bf16.msra.mxu0 0
    %680 = vmatpush.bf16.msra.mxu0 0
    %681 = vmatpush.bf16.msra.mxu0 %v264
    %682 = vmatpush.bf16.msra.mxu0 %v263
    %683 = vmatmul.bf16.gmra.mxu0 %v603
    %v684 = vpop.f32.mrf.mxu0
    %v685 = vadd.f32 0.0, %v684
    %v686 = vpop.f32.mrf.mxu0
    %687 = vdwg.mxu0
    %v688 = vadd.f32 %v227, %v685
    %v689 = vxor.u32 %v688, 2147483648
    %v690 = vmul.f32 %v689, 1.442695
    %v691 = vpow.pop %v690
    %v692 = vadd.f32 %v691, 1.0
    %v693 = vrcp.pop %v692
    %v694 = vmul.f32 %v692, %v693
    %v695 = vsub.f32 1.0, %v694
    %v696 = vmul.f32 %v693, %v695
    %v697 = vadd.f32 %v693, %v696
    %vm698 = vweird.f32 %v692
    %vm699 = vweird.f32 %v693
    %vm700 = vmor %vm698, %vm699
    %v701 = vsel %vm700, %v693, %v697
    %v702 = vand.u32 2147483647, %v692
    %vm703 = vcmp.eq.f32.partialorder %v702, 8.507059e+37
    %v704 = vand.u32 %v692, 2147483648
    %v705 = vor.u32 1.1754944e-38, %v704
    %v706 = vsel %vm703, %v705, %v701
    %v707 = vmul.f32 1.0, %v706
    %v708 = vtanh.pop %v688
    %v709 = vmul.f32 %v707, %v590
    %711 = vrot.lane.b32.xlu0 %v708, 64
    %v712 = vpop.permute.xlu0 %711
    %v714 = vmul.f32 %v707, %v712
    %716 = vrot.lane.b32.xlu0 %v714, 32
    %v717 = vpop.permute.xlu0 %716
    %v719 = vadd.f32 %v709, %v717
    %v720 = vtanh.pop %v719
    %722 = vrot.lane.b32.xlu0 %v720, 64
    %v723 = vpop.permute.xlu0 %722
    %v725 = vmul.f32 %v707, %v723
    %v726 = vpack.c.bf16 %v674, %v674
    %v727 = vpack.c.bf16 %v725, %v725
    %729 = vrot.lane.b32.xlu0 %v727, 32
    %v730 = vpop.permute.xlu0 %729
    %v732 = vsel %vm267, %v730, 0
    %734 = vmatpush.bf16.msra.mxu0 0
    %735 = vmatpush.bf16.msra.mxu0 0
    %736 = vmatpush.bf16.msra.mxu0 0
    %737 = vmatpush.bf16.msra.mxu0 0
    %738 = vmatpush.bf16.msra.mxu0 0
    %739 = vmatpush.bf16.msra.mxu0 0
    %740 = vmatpush.bf16.msra.mxu0 %v335
    %741 = vmatpush.bf16.msra.mxu0 %v334
    %742 = vmatmul.bf16.gmra.mxu0 %v732
    %v743 = vpop.f32.mrf.mxu0
    %v744 = vadd.f32 0.0, %v743
    %v745 = vpop.f32.mrf.mxu0
    %746 = vdwg.mxu0
    %748 = vrot.lane.b32.xlu0 %v726, 32
    %v749 = vpop.permute.xlu0 %748
    %v751 = vsel %vm267, %v749, 0
    %753 = vmatpush.bf16.msra.mxu0 0
    %754 = vmatpush.bf16.msra.mxu0 0
    %755 = vmatpush.bf16.msra.mxu0 0
    %756 = vmatpush.bf16.msra.mxu0 0
    %757 = vmatpush.bf16.msra.mxu0 0
    %758 = vmatpush.bf16.msra.mxu0 0
    %759 = vmatpush.bf16.msra.mxu0 %v363
    %760 = vmatpush.bf16.msra.mxu0 %v362
    %761 = vmatmul.bf16.gmra.mxu0 %v751
    %v762 = vpop.f32.mrf.mxu0
    %v763 = vadd.f32 %v744, %v762
    %v764 = vpop.f32.mrf.mxu0
    %765 = vdwg.mxu0
    %v766 = vadd.f32 %v763, %v253
    %v767 = vxor.u32 %v766, 2147483648
    %v768 = vmul.f32 %v767, 1.442695
    %v769 = vpow.pop %v768
    %v770 = vadd.f32 %v769, 1.0
    %v771 = vrcp.pop %v770
    %v772 = vmul.f32 %v770, %v771
    %v773 = vsub.f32 1.0, %v772
    %v774 = vmul.f32 %v771, %v773
    %v775 = vadd.f32 %v771, %v774
    %vm776 = vweird.f32 %v770
    %vm777 = vweird.f32 %v771
    %vm778 = vmor %vm776, %vm777
    %v779 = vsel %vm778, %v771, %v775
    %v780 = vand.u32 2147483647, %v770
    %vm781 = vcmp.eq.f32.partialorder %v780, 8.507059e+37
    %v782 = vand.u32 %v770, 2147483648
    %v783 = vor.u32 1.1754944e-38, %v782
    %v784 = vsel %vm781, %v783, %v779
    %v785 = vmul.f32 1.0, %v784
    %v786 = vtanh.pop %v766
    %v787 = vmul.f32 %v785, %v668
    %789 = vrot.lane.b32.xlu0 %v786, 64
    %v790 = vpop.permute.xlu0 %789
    %v792 = vmul.f32 %v785, %v790
    %794 = vrot.lane.b32.xlu0 %v792, 32
    %v795 = vpop.permute.xlu0 %794
    %v797 = vadd.f32 %v787, %v795
    %v798 = vtanh.pop %v797
    %800 = vrot.lane.b32.xlu0 %v798, 64
    %v801 = vpop.permute.xlu0 %800
    %v803 = vmul.f32 %v785, %v801
    %804 = vmatpush.bf16.msra.mxu0 0
    %805 = vmatpush.bf16.msra.mxu0 0
    %806 = vmatpush.bf16.msra.mxu0 0
    %807 = vmatpush.bf16.msra.mxu0 0
    %808 = vmatpush.bf16.msra.mxu0 0
    %809 = vmatpush.bf16.msra.mxu0 0
    %810 = vmatpush.bf16.msra.mxu0 %v264
    %811 = vmatpush.bf16.msra.mxu0 %v263
    %812 = vmatmul.bf16.gmra.mxu0 %v732
    %v813 = vpop.f32.mrf.mxu0
    %v814 = vadd.f32 0.0, %v813
    %v815 = vpop.f32.mrf.mxu0
    %816 = vdwg.mxu0
    %v817 = vadd.f32 %v230, %v814
    %v818 = vxor.u32 %v817, 2147483648
    %v819 = vmul.f32 %v818, 1.442695
    %v820 = vpow.pop %v819
    %v821 = vadd.f32 %v820, 1.0
    %v822 = vrcp.pop %v821
    %v823 = vmul.f32 %v821, %v822
    %v824 = vsub.f32 1.0, %v823
    %v825 = vmul.f32 %v822, %v824
    %v826 = vadd.f32 %v822, %v825
    %vm827 = vweird.f32 %v821
    %vm828 = vweird.f32 %v822
    %vm829 = vmor %vm827, %vm828
    %v830 = vsel %vm829, %v822, %v826
    %v831 = vand.u32 2147483647, %v821
    %vm832 = vcmp.eq.f32.partialorder %v831, 8.507059e+37
    %v833 = vand.u32 %v821, 2147483648
    %v834 = vor.u32 1.1754944e-38, %v833
    %v835 = vsel %vm832, %v834, %v830
    %v836 = vmul.f32 1.0, %v835
    %v837 = vtanh.pop %v817
    %v838 = vmul.f32 %v836, %v719
    %840 = vrot.lane.b32.xlu0 %v837, 64
    %v841 = vpop.permute.xlu0 %840
    %v843 = vmul.f32 %v836, %v841
    %845 = vrot.lane.b32.xlu0 %v843, 32
    %v846 = vpop.permute.xlu0 %845
    %v848 = vadd.f32 %v838, %v846
    %v849 = vtanh.pop %v848
    %851 = vrot.lane.b32.xlu0 %v849, 64
    %v852 = vpop.permute.xlu0 %851
    %v854 = vmul.f32 %v836, %v852
    %v855 = vpack.c.bf16 %v803, %v803
    %v856 = vpack.c.bf16 %v854, %v854
    %858 = vrot.lane.b32.xlu0 %v856, 32
    %v859 = vpop.permute.xlu0 %858
    %v861 = vsel %vm267, %v859, 0
    %863 = vmatpush.bf16.msra.mxu0 0
    %864 = vmatpush.bf16.msra.mxu0 0
    %865 = vmatpush.bf16.msra.mxu0 0
    %866 = vmatpush.bf16.msra.mxu0 0
    %867 = vmatpush.bf16.msra.mxu0 0
    %868 = vmatpush.bf16.msra.mxu0 0
    %869 = vmatpush.bf16.msra.mxu0 %v335
    %870 = vmatpush.bf16.msra.mxu0 %v334
    %871 = vmatmul.bf16.gmra.mxu0 %v861
    %v872 = vpop.f32.mrf.mxu0
    %v873 = vadd.f32 0.0, %v872
    %v874 = vpop.f32.mrf.mxu0
    %875 = vdwg.mxu0
    %877 = vrot.lane.b32.xlu0 %v855, 32
    %v878 = vpop.permute.xlu0 %877
    %v880 = vsel %vm267, %v878, 0
    %882 = vmatpush.bf16.msra.mxu0 0
    %883 = vmatpush.bf16.msra.mxu0 0
    %884 = vmatpush.bf16.msra.mxu0 0
    %885 = vmatpush.bf16.msra.mxu0 0
    %886 = vmatpush.bf16.msra.mxu0 0
    %887 = vmatpush.bf16.msra.mxu0 0
    %888 = vmatpush.bf16.msra.mxu0 %v363
    %889 = vmatpush.bf16.msra.mxu0 %v362
    %890 = vmatmul.bf16.gmra.mxu0 %v880
    %v891 = vpop.f32.mrf.mxu0
    %v892 = vadd.f32 %v873, %v891
    %v893 = vpop.f32.mrf.mxu0
    %894 = vdwg.mxu0
    %v895 = vadd.f32 %v892, %v253
    %v896 = vxor.u32 %v895, 2147483648
    %v897 = vmul.f32 %v896, 1.442695
    %v898 = vpow.pop %v897
    %v899 = vadd.f32 %v898, 1.0
    %v900 = vrcp.pop %v899
    %v901 = vmul.f32 %v899, %v900
    %v902 = vsub.f32 1.0, %v901
    %v903 = vmul.f32 %v900, %v902
    %v904 = vadd.f32 %v900, %v903
    %vm905 = vweird.f32 %v899
    %vm906 = vweird.f32 %v900
    %vm907 = vmor %vm905, %vm906
    %v908 = vsel %vm907, %v900, %v904
    %v909 = vand.u32 2147483647, %v899
    %vm910 = vcmp.eq.f32.partialorder %v909, 8.507059e+37
    %v911 = vand.u32 %v899, 2147483648
    %v912 = vor.u32 1.1754944e-38, %v911
    %v913 = vsel %vm910, %v912, %v908
    %v914 = vmul.f32 1.0, %v913
    %v915 = vtanh.pop %v895
    %v916 = vmul.f32 %v914, %v797
    %918 = vrot.lane.b32.xlu0 %v915, 64
    %v919 = vpop.permute.xlu0 %918
    %v921 = vmul.f32 %v914, %v919
    %923 = vrot.lane.b32.xlu0 %v921, 32
    %v924 = vpop.permute.xlu0 %923
    %v926 = vadd.f32 %v916, %v924
    %v927 = vtanh.pop %v926
    %929 = vrot.lane.b32.xlu0 %v927, 64
    %v930 = vpop.permute.xlu0 %929
    %v932 = vmul.f32 %v914, %v930
    %933 = vmatpush.bf16.msra.mxu0 0
    %934 = vmatpush.bf16.msra.mxu0 0
    %935 = vmatpush.bf16.msra.mxu0 0
    %936 = vmatpush.bf16.msra.mxu0 0
    %937 = vmatpush.bf16.msra.mxu0 0
    %938 = vmatpush.bf16.msra.mxu0 0
    %939 = vmatpush.bf16.msra.mxu0 %v264
    %940 = vmatpush.bf16.msra.mxu0 %v263
    %941 = vmatmul.bf16.gmra.mxu0 %v861
    %v942 = vpop.f32.mrf.mxu0
    %v943 = vadd.f32 0.0, %v942
    %v944 = vpop.f32.mrf.mxu0
    %945 = vdwg.mxu0
    %v946 = vadd.f32 %v232, %v943
    %v947 = vxor.u32 %v946, 2147483648
    %v948 = vmul.f32 %v947, 1.442695
    %v949 = vpow.pop %v948
    %v950 = vadd.f32 %v949, 1.0
    %v951 = vrcp.pop %v950
    %v952 = vmul.f32 %v950, %v951
    %v953 = vsub.f32 1.0, %v952
    %v954 = vmul.f32 %v951, %v953
    %v955 = vadd.f32 %v951, %v954
    %vm956 = vweird.f32 %v950
    %vm957 = vweird.f32 %v951
    %vm958 = vmor %vm956, %vm957
    %v959 = vsel %vm958, %v951, %v955
    %v960 = vand.u32 2147483647, %v950
    %vm961 = vcmp.eq.f32.partialorder %v960, 8.507059e+37
    %v962 = vand.u32 %v950, 2147483648
    %v963 = vor.u32 1.1754944e-38, %v962
    %v964 = vsel %vm961, %v963, %v959
    %v965 = vmul.f32 1.0, %v964
    %v966 = vtanh.pop %v946
    %v967 = vmul.f32 %v965, %v848
    %969 = vrot.lane.b32.xlu0 %v966, 64
    %v970 = vpop.permute.xlu0 %969
    %v972 = vmul.f32 %v965, %v970
    %974 = vrot.lane.b32.xlu0 %v972, 32
    %v975 = vpop.permute.xlu0 %974
    %v977 = vadd.f32 %v967, %v975
    %v978 = vtanh.pop %v977
    %980 = vrot.lane.b32.xlu0 %v978, 64
    %v981 = vpop.permute.xlu0 %980
    %v983 = vmul.f32 %v965, %v981
    %v984 = vpack.c.bf16 %v932, %v932
    %v985 = vpack.c.bf16 %v983, %v983
    %987 = vrot.lane.b32.xlu0 %v985, 32
    %v988 = vpop.permute.xlu0 %987
    %v990 = vsel %vm267, %v988, 0
    %992 = vmatpush.bf16.msra.mxu0 0
    %993 = vmatpush.bf16.msra.mxu0 0
    %994 = vmatpush.bf16.msra.mxu0 0
    %995 = vmatpush.bf16.msra.mxu0 0
    %996 = vmatpush.bf16.msra.mxu0 0
    %997 = vmatpush.bf16.msra.mxu0 0
    %998 = vmatpush.bf16.msra.mxu0 %v335
    %999 = vmatpush.bf16.msra.mxu0 %v334
    %1000 = vmatmul.bf16.gmra.mxu0 %v990
    %v1001 = vpop.f32.mrf.mxu0
    %v1002 = vadd.f32 0.0, %v1001
    %v1003 = vpop.f32.mrf.mxu0
    %1004 = vdwg.mxu0
    %1006 = vrot.lane.b32.xlu0 %v984, 32
    %v1007 = vpop.permute.xlu0 %1006
    %v1009 = vsel %vm267, %v1007, 0
    %1011 = vmatpush.bf16.msra.mxu0 0
    %1012 = vmatpush.bf16.msra.mxu0 0
    %1013 = vmatpush.bf16.msra.mxu0 0
    %1014 = vmatpush.bf16.msra.mxu0 0
    %1015 = vmatpush.bf16.msra.mxu0 0
    %1016 = vmatpush.bf16.msra.mxu0 0
    %1017 = vmatpush.bf16.msra.mxu0 %v363
    %1018 = vmatpush.bf16.msra.mxu0 %v362
    %1019 = vmatmul.bf16.gmra.mxu0 %v1009
    %v1020 = vpop.f32.mrf.mxu0
    %v1021 = vadd.f32 %v1002, %v1020
    %v1022 = vpop.f32.mrf.mxu0
    %1023 = vdwg.mxu0
    %v1024 = vadd.f32 %v1021, %v253
    %v1025 = vxor.u32 %v1024, 2147483648
    %v1026 = vmul.f32 %v1025, 1.442695
    %v1027 = vpow.pop %v1026
    %v1028 = vadd.f32 %v1027, 1.0
    %v1029 = vrcp.pop %v1028
    %v1030 = vmul.f32 %v1028, %v1029
    %v1031 = vsub.f32 1.0, %v1030
    %v1032 = vmul.f32 %v1029, %v1031
    %v1033 = vadd.f32 %v1029, %v1032
    %vm1034 = vweird.f32 %v1028
    %vm1035 = vweird.f32 %v1029
    %vm1036 = vmor %vm1034, %vm1035
    %v1037 = vsel %vm1036, %v1029, %v1033
    %v1038 = vand.u32 2147483647, %v1028
    %vm1039 = vcmp.eq.f32.partialorder %v1038, 8.507059e+37
    %v1040 = vand.u32 %v1028, 2147483648
    %v1041 = vor.u32 1.1754944e-38, %v1040
    %v1042 = vsel %vm1039, %v1041, %v1037
    %v1043 = vmul.f32 1.0, %v1042
    %v1044 = vtanh.pop %v1024
    %v1045 = vmul.f32 %v1043, %v926
    %1047 = vrot.lane.b32.xlu0 %v1044, 64
    %v1048 = vpop.permute.xlu0 %1047
    %v1050 = vmul.f32 %v1043, %v1048
    %1052 = vrot.lane.b32.xlu0 %v1050, 32
    %v1053 = vpop.permute.xlu0 %1052
    %v1055 = vadd.f32 %v1045, %v1053
    %v1056 = vtanh.pop %v1055
    %1058 = vrot.lane.b32.xlu0 %v1056, 64
    %v1059 = vpop.permute.xlu0 %1058
    %v1061 = vmul.f32 %v1043, %v1059
    %1062 = vmatpush.bf16.msra.mxu0 0
    %1063 = vmatpush.bf16.msra.mxu0 0
    %1064 = vmatpush.bf16.msra.mxu0 0
    %1065 = vmatpush.bf16.msra.mxu0 0
    %1066 = vmatpush.bf16.msra.mxu0 0
    %1067 = vmatpush.bf16.msra.mxu0 0
    %1068 = vmatpush.bf16.msra.mxu0 %v264
    %1069 = vmatpush.bf16.msra.mxu0 %v263
    %1070 = vmatmul.bf16.gmra.mxu0 %v990
    %v1071 = vpop.f32.mrf.mxu0
    %v1072 = vadd.f32 0.0, %v1071
    %v1073 = vpop.f32.mrf.mxu0
    %1074 = vdwg.mxu0
    %v1075 = vadd.f32 %v235, %v1072
    %v1076 = vxor.u32 %v1075, 2147483648
    %v1077 = vmul.f32 %v1076, 1.442695
    %v1078 = vpow.pop %v1077
    %v1079 = vadd.f32 %v1078, 1.0
    %v1080 = vrcp.pop %v1079
    %v1081 = vmul.f32 %v1079, %v1080
    %v1082 = vsub.f32 1.0, %v1081
    %v1083 = vmul.f32 %v1080, %v1082
    %v1084 = vadd.f32 %v1080, %v1083
    %vm1085 = vweird.f32 %v1079
    %vm1086 = vweird.f32 %v1080
    %vm1087 = vmor %vm1085, %vm1086
    %v1088 = vsel %vm1087, %v1080, %v1084
    %v1089 = vand.u32 2147483647, %v1079
    %vm1090 = vcmp.eq.f32.partialorder %v1089, 8.507059e+37
    %v1091 = vand.u32 %v1079, 2147483648
    %v1092 = vor.u32 1.1754944e-38, %v1091
    %v1093 = vsel %vm1090, %v1092, %v1088
    %v1094 = vmul.f32 1.0, %v1093
    %v1095 = vtanh.pop %v1075
    %v1096 = vmul.f32 %v1094, %v977
    %1098 = vrot.lane.b32.xlu0 %v1095, 64
    %v1099 = vpop.permute.xlu0 %1098
    %v1101 = vmul.f32 %v1094, %v1099
    %1103 = vrot.lane.b32.xlu0 %v1101, 32
    %v1104 = vpop.permute.xlu0 %1103
    %v1106 = vadd.f32 %v1096, %v1104
    %v1107 = vtanh.pop %v1106
    %1109 = vrot.lane.b32.xlu0 %v1107, 64
    %v1110 = vpop.permute.xlu0 %1109
    %v1112 = vmul.f32 %v1094, %v1110
    %v1113 = vpack.c.bf16 %v1061, %v1061
    %v1114 = vpack.c.bf16 %v1112, %v1112
    %1116 = vrot.lane.b32.xlu0 %v1114, 32
    %v1117 = vpop.permute.xlu0 %1116
    %v1119 = vsel %vm267, %v1117, 0
    %1121 = vmatpush.bf16.msra.mxu0 0
    %1122 = vmatpush.bf16.msra.mxu0 0
    %1123 = vmatpush.bf16.msra.mxu0 0
    %1124 = vmatpush.bf16.msra.mxu0 0
    %1125 = vmatpush.bf16.msra.mxu0 0
    %1126 = vmatpush.bf16.msra.mxu0 0
    %1127 = vmatpush.bf16.msra.mxu0 %v335
    %1128 = vmatpush.bf16.msra.mxu0 %v334
    %1129 = vmatmul.bf16.gmra.mxu0 %v1119
    %v1130 = vpop.f32.mrf.mxu0
    %v1131 = vadd.f32 0.0, %v1130
    %v1132 = vpop.f32.mrf.mxu0
    %1133 = vdwg.mxu0
    %1135 = vrot.lane.b32.xlu0 %v1113, 32
    %v1136 = vpop.permute.xlu0 %1135
    %v1138 = vsel %vm267, %v1136, 0
    %1140 = vmatpush.bf16.msra.mxu0 0
    %1141 = vmatpush.bf16.msra.mxu0 0
    %1142 = vmatpush.bf16.msra.mxu0 0
    %1143 = vmatpush.bf16.msra.mxu0 0
    %1144 = vmatpush.bf16.msra.mxu0 0
    %1145 = vmatpush.bf16.msra.mxu0 0
    %1146 = vmatpush.bf16.msra.mxu0 %v363
    %1147 = vmatpush.bf16.msra.mxu0 %v362
    %1148 = vmatmul.bf16.gmra.mxu0 %v1138
    %v1149 = vpop.f32.mrf.mxu0
    %v1150 = vadd.f32 %v1131, %v1149
    %v1151 = vpop.f32.mrf.mxu0
    %1152 = vdwg.mxu0
    %v1153 = vadd.f32 %v1150, %v253
    %v1154 = vxor.u32 %v1153, 2147483648
    %v1155 = vmul.f32 %v1154, 1.442695
    %v1156 = vpow.pop %v1155
    %v1157 = vadd.f32 %v1156, 1.0
    %v1158 = vrcp.pop %v1157
    %v1159 = vmul.f32 %v1157, %v1158
    %v1160 = vsub.f32 1.0, %v1159
    %v1161 = vmul.f32 %v1158, %v1160
    %v1162 = vadd.f32 %v1158, %v1161
    %vm1163 = vweird.f32 %v1157
    %vm1164 = vweird.f32 %v1158
    %vm1165 = vmor %vm1163, %vm1164
    %v1166 = vsel %vm1165, %v1158, %v1162
    %v1167 = vand.u32 2147483647, %v1157
    %vm1168 = vcmp.eq.f32.partialorder %v1167, 8.507059e+37
    %v1169 = vand.u32 %v1157, 2147483648
    %v1170 = vor.u32 1.1754944e-38, %v1169
    %v1171 = vsel %vm1168, %v1170, %v1166
    %v1172 = vmul.f32 1.0, %v1171
    %v1173 = vtanh.pop %v1153
    %v1174 = vmul.f32 %v1172, %v1055
    %1176 = vrot.lane.b32.xlu0 %v1173, 64
    %v1177 = vpop.permute.xlu0 %1176
    %v1179 = vmul.f32 %v1172, %v1177
    %1181 = vrot.lane.b32.xlu0 %v1179, 32
    %v1182 = vpop.permute.xlu0 %1181
    %v1184 = vadd.f32 %v1174, %v1182
    %v1185 = vtanh.pop %v1184
    %1187 = vrot.lane.b32.xlu0 %v1185, 64
    %v1188 = vpop.permute.xlu0 %1187
    %v1190 = vmul.f32 %v1172, %v1188
    %1191 = vmatpush.bf16.msra.mxu0 0
    %1192 = vmatpush.bf16.msra.mxu0 0
    %1193 = vmatpush.bf16.msra.mxu0 0
    %1194 = vmatpush.bf16.msra.mxu0 0
    %1195 = vmatpush.bf16.msra.mxu0 0
    %1196 = vmatpush.bf16.msra.mxu0 0
    %1197 = vmatpush.bf16.msra.mxu0 %v264
    %1198 = vmatpush.bf16.msra.mxu0 %v263
    %1199 = vmatmul.bf16.gmra.mxu0 %v1119
    %v1200 = vpop.f32.mrf.mxu0
    %v1201 = vadd.f32 0.0, %v1200
    %v1202 = vpop.f32.mrf.mxu0
    %1203 = vdwg.mxu0
    %v1204 = vadd.f32 %v237, %v1201
    %v1205 = vxor.u32 %v1204, 2147483648
    %v1206 = vmul.f32 %v1205, 1.442695
    %v1207 = vpow.pop %v1206
    %v1208 = vadd.f32 %v1207, 1.0
    %v1209 = vrcp.pop %v1208
    %v1210 = vmul.f32 %v1208, %v1209
    %v1211 = vsub.f32 1.0, %v1210
    %v1212 = vmul.f32 %v1209, %v1211
    %v1213 = vadd.f32 %v1209, %v1212
    %vm1214 = vweird.f32 %v1208
    %vm1215 = vweird.f32 %v1209
    %vm1216 = vmor %vm1214, %vm1215
    %v1217 = vsel %vm1216, %v1209, %v1213
    %v1218 = vand.u32 2147483647, %v1208
    %vm1219 = vcmp.eq.f32.partialorder %v1218, 8.507059e+37
    %v1220 = vand.u32 %v1208, 2147483648
    %v1221 = vor.u32 1.1754944e-38, %v1220
    %v1222 = vsel %vm1219, %v1221, %v1217
    %v1223 = vmul.f32 1.0, %v1222
    %v1224 = vtanh.pop %v1204
    %v1225 = vmul.f32 %v1223, %v1106
    %1227 = vrot.lane.b32.xlu0 %v1224, 64
    %v1228 = vpop.permute.xlu0 %1227
    %v1230 = vmul.f32 %v1223, %v1228
    %1232 = vrot.lane.b32.xlu0 %v1230, 32
    %v1233 = vpop.permute.xlu0 %1232
    %v1235 = vadd.f32 %v1225, %v1233
    %v1236 = vtanh.pop %v1235
    %1238 = vrot.lane.b32.xlu0 %v1236, 64
    %v1239 = vpop.permute.xlu0 %1238
    %v1241 = vmul.f32 %v1223, %v1239
    %v1242 = vpack.c.bf16 %v1190, %v1190
    %v1243 = vpack.c.bf16 %v1241, %v1241
    %1245 = vrot.lane.b32.xlu0 %v1243, 32
    %v1246 = vpop.permute.xlu0 %1245
    %v1248 = vsel %vm267, %v1246, 0
    %1250 = vmatpush.bf16.msra.mxu0 0
    %1251 = vmatpush.bf16.msra.mxu0 0
    %1252 = vmatpush.bf16.msra.mxu0 0
    %1253 = vmatpush.bf16.msra.mxu0 0
    %1254 = vmatpush.bf16.msra.mxu0 0
    %1255 = vmatpush.bf16.msra.mxu0 0
    %1256 = vmatpush.bf16.msra.mxu0 %v335
    %1257 = vmatpush.bf16.msra.mxu0 %v334
    %1258 = vmatmul.bf16.gmra.mxu0 %v1248
    %v1259 = vpop.f32.mrf.mxu0
    %v1260 = vadd.f32 0.0, %v1259
    %v1261 = vpop.f32.mrf.mxu0
    %1262 = vdwg.mxu0
    %1264 = vrot.lane.b32.xlu0 %v1242, 32
    %v1265 = vpop.permute.xlu0 %1264
    %v1267 = vsel %vm267, %v1265, 0
    %1269 = vmatpush.bf16.msra.mxu0 0
    %1270 = vmatpush.bf16.msra.mxu0 0
    %1271 = vmatpush.bf16.msra.mxu0 0
    %1272 = vmatpush.bf16.msra.mxu0 0
    %1273 = vmatpush.bf16.msra.mxu0 0
    %1274 = vmatpush.bf16.msra.mxu0 0
    %1275 = vmatpush.bf16.msra.mxu0 %v363
    %1276 = vmatpush.bf16.msra.mxu0 %v362
    %1277 = vmatmul.bf16.gmra.mxu0 %v1267
    %v1278 = vpop.f32.mrf.mxu0
    %v1279 = vadd.f32 %v1260, %v1278
    %v1280 = vpop.f32.mrf.mxu0
    %1281 = vdwg.mxu0
    %v1282 = vadd.f32 %v1279, %v253
    %v1283 = vxor.u32 %v1282, 2147483648
    %v1284 = vmul.f32 %v1283, 1.442695
    %v1285 = vpow.pop %v1284
    %v1286 = vadd.f32 %v1285, 1.0
    %v1287 = vrcp.pop %v1286
    %v1288 = vmul.f32 %v1286, %v1287
    %v1289 = vsub.f32 1.0, %v1288
    %v1290 = vmul.f32 %v1287, %v1289
    %v1291 = vadd.f32 %v1287, %v1290
    %vm1292 = vweird.f32 %v1286
    %vm1293 = vweird.f32 %v1287
    %vm1294 = vmor %vm1292, %vm1293
    %v1295 = vsel %vm1294, %v1287, %v1291
    %v1296 = vand.u32 2147483647, %v1286
    %vm1297 = vcmp.eq.f32.partialorder %v1296, 8.507059e+37
    %v1298 = vand.u32 %v1286, 2147483648
    %v1299 = vor.u32 1.1754944e-38, %v1298
    %v1300 = vsel %vm1297, %v1299, %v1295
    %v1301 = vmul.f32 1.0, %v1300
    %v1302 = vtanh.pop %v1282
    %v1303 = vmul.f32 %v1301, %v1184
    %1305 = vrot.lane.b32.xlu0 %v1302, 64
    %v1306 = vpop.permute.xlu0 %1305
    %v1308 = vmul.f32 %v1301, %v1306
    %1310 = vrot.lane.b32.xlu0 %v1308, 32
    %v1311 = vpop.permute.xlu0 %1310
    %v1313 = vadd.f32 %v1303, %v1311
    %v1314 = vtanh.pop %v1313
    %1316 = vrot.lane.b32.xlu0 %v1314, 64
    %v1317 = vpop.permute.xlu0 %1316
    %v1319 = vmul.f32 %v1301, %v1317
    %v1320 = vld [vmem:[#allocation2] sm:$0xff]
    %v1321 = vpack.c.bf16 %v1319, %v1319
    %v1322 = vld [vmem:[#allocation7] sm:$0xf]
    %v1323 = vld [vmem:[#allocation7 + $0x4] sm:$0xf]
    %v1324 = vld [vmem:[#allocation7 + $0x8] sm:$0xf]
    %v1325 = vld [vmem:[#allocation7 + $0xc] sm:$0xf]
    %1327 = vrot.lane.b32.xlu0 %v1321, 32
    %v1328 = vpop.permute.xlu0 %1327
    %v1333 = vunpack.c.l.b16 %v1322
    %v1334 = vunpack.c.l.b16 %v1323
    %v1335 = vunpack.c.l.b16 %v1324
    %v1336 = vunpack.c.l.b16 %v1325
    %v1337 = vpack.c.b16 %v1334, %v1333
    %v1338 = vpack.c.b16 %v1336, %v1335
    %v1342 = vsel %vm267, %v1328, 0
    %1344 = vmatpush.bf16.msra.mxu0 0
    %1345 = vmatpush.bf16.msra.mxu0 0
    %1346 = vmatpush.bf16.msra.mxu0 0
    %1347 = vmatpush.bf16.msra.mxu0 0
    %1348 = vmatpush.bf16.msra.mxu0 0
    %1349 = vmatpush.bf16.msra.mxu0 0
    %1350 = vmatpush.bf16.msra.mxu0 %v1338
    %1351 = vmatpush.bf16.msra.mxu0 %v1337
    %1352 = vmatmul.bf16.gmra.mxu0 %v1342
    %v1353 = vpop.f32.mrf.mxu0
    %v1354 = vadd.f32 0.0, %v1353
    %v1355 = vpop.f32.mrf.mxu0
    %1356 = vdwg.mxu0
    %v1357 = vld [vmem:[#allocation9] sm:$0x1]
    %v1359 = vperm.slane %v1357, 0
    %vm1361 = vcmask 64512
    %v1363 = vsel %vm1361, %v1320, 0
    %1365 = vmatpush.msra.mxu0 0.0
    %1366 = vmatpush.msra.mxu0 0.0
    %1367 = vmatpush.msra.mxu0 0.0
    %1368 = vmatpush.msra.mxu0 0.0
    %1369 = vmatpush.msra.mxu0 0.0
    %1370 = vmatpush.msra.mxu0 0.0
    %1371 = vmatpush.msra.mxu0 0.0
    %1372 = vmatpush.msra.mxu0 0.0
    %1373 = vmatpush.msra.mxu0 0.0
    %1374 = vmatpush.msra.mxu0 0.0
    %1375 = vmatpush.msra.mxu0 0.0
    %1376 = vmatpush.msra.mxu0 0.0
    %1377 = vmatpush.msra.mxu0 0.0
    %1378 = vmatpush.msra.mxu0 0.0
    %1379 = vmatpush.msra.mxu0 0.0
    %1380 = vmatpush.msra.mxu0 %v1354
    %1381 = vmatmul.f32.gmra.mxu0 %v1363
    %v1382 = vpop.f32.mrf.mxu0
    %v1383 = vadd.f32 %v1359, %v1382
    %1384 = vdwg.mxu0
    %v1385 = vmax.f32 %v1383, 0.0
    %v1386 = vpack.c.bf16 %v1385, %v1385
    %v1387 = vld [vmem:[%s9] sm:$0xf]
    %v1388 = vld [vmem:[%s9 + $0x4] sm:$0xf]
    %v1389 = vld [vmem:[%s9 + $0x8] sm:$0xf]
    %v1390 = vld [vmem:[%s9 + $0xc] sm:$0xf]
    %v1391 = vld [vmem:[%s9 + $0x10] sm:$0xf]
    %v1392 = vld [vmem:[%s9 + $0x14] sm:$0xf]
    %v1393 = vld [vmem:[%s9 + $0x18] sm:$0xf]
    %v1394 = vld [vmem:[%s9 + $0x1c] sm:$0xf]
    %v1395 = vld [vmem:[%s9 + $0x20] sm:$0xf]
    %v1396 = vld [vmem:[%s9 + $0x24] sm:$0xf]
    %v1397 = vld [vmem:[%s9 + $0x28] sm:$0xf]
    %v1398 = vld [vmem:[%s9 + $0x2c] sm:$0xf]
    %v1399 = vld [vmem:[%s9 + $0x30] sm:$0xf]
    %v1400 = vld [vmem:[%s9 + $0x34] sm:$0xf]
    %v1401 = vld [vmem:[%s9 + $0x38] sm:$0xf]
    %v1402 = vld [vmem:[%s9 + $0x3c] sm:$0xf]
    %v1419 = vunpack.c.l.b16 %v1387
    %v1420 = vunpack.c.l.b16 %v1388
    %v1421 = vunpack.c.l.b16 %v1389
    %v1422 = vunpack.c.l.b16 %v1390
    %v1423 = vunpack.c.l.b16 %v1391
    %v1424 = vunpack.c.l.b16 %v1392
    %v1425 = vunpack.c.l.b16 %v1393
    %v1426 = vunpack.c.l.b16 %v1394
    %v1427 = vunpack.c.l.b16 %v1395
    %v1428 = vunpack.c.l.b16 %v1396
    %v1429 = vunpack.c.l.b16 %v1397
    %v1430 = vunpack.c.l.b16 %v1398
    %v1431 = vunpack.c.l.b16 %v1399
    %v1432 = vunpack.c.l.b16 %v1400
    %v1433 = vunpack.c.l.b16 %v1401
    %v1434 = vunpack.c.l.b16 %v1402
    %v1435 = vpack.c.b16 %v1420, %v1419
    %v1436 = vpack.c.b16 %v1422, %v1421
    %v1437 = vpack.c.b16 %v1424, %v1423
    %v1438 = vpack.c.b16 %v1426, %v1425
    %v1439 = vpack.c.b16 %v1428, %v1427
    %v1440 = vpack.c.b16 %v1430, %v1429
    %v1441 = vpack.c.b16 %v1432, %v1431
    %v1442 = vpack.c.b16 %v1434, %v1433
    %1451 = vmatpush.bf16.msra.mxu0 %v1442
    %1452 = vmatpush.bf16.msra.mxu0 %v1441
    %1453 = vmatpush.bf16.msra.mxu0 %v1440
    %1454 = vmatpush.bf16.msra.mxu0 %v1439
    %1455 = vmatpush.bf16.msra.mxu0 %v1438
    %1456 = vmatpush.bf16.msra.mxu0 %v1437
    %1457 = vmatpush.bf16.msra.mxu0 %v1436
    %1458 = vmatpush.bf16.msra.mxu0 %v1435
    %1459 = vmatmul.bf16.gmra.mxu0 %v1386
    %v1460 = vpop.f32.mrf.mxu0
    %v1461 = vadd.f32 0.0, %v1460
    %v1462 = vpop.f32.mrf.mxu0
    %1463 = vdwg.mxu0
    %v1464 = vld [vmem:[#allocation10] sm:$0x1]
    %v1466 = vperm.slane %v1464, 0
    %1468 = vmatpush.msra.mxu0 0.0
    %1469 = vmatpush.msra.mxu0 0.0
    %1470 = vmatpush.msra.mxu0 0.0
    %1471 = vmatpush.msra.mxu0 0.0
    %1472 = vmatpush.msra.mxu0 0.0
    %1473 = vmatpush.msra.mxu0 0.0
    %1474 = vmatpush.msra.mxu0 0.0
    %1475 = vmatpush.msra.mxu0 0.0
    %1476 = vmatpush.msra.mxu0 0.0
    %1477 = vmatpush.msra.mxu0 0.0
    %1478 = vmatpush.msra.mxu0 0.0
    %1479 = vmatpush.msra.mxu0 0.0
    %1480 = vmatpush.msra.mxu0 0.0
    %1481 = vmatpush.msra.mxu0 0.0
    %1482 = vmatpush.msra.mxu0 0.0
    %1483 = vmatpush.msra.mxu0 %v1461
    %1484 = vmatmul.f32.gmra.mxu0 %v1363
    %v1485 = vpop.f32.mrf.mxu0
    %v1486 = vadd.f32 %v1466, %v1485
    %1487 = vdwg.mxu0
    %v1488 = vpack.c.bf16 %v1486, %v1486
    %v1489 = vld [vmem:[%s11] sm:$0xf]
    %v1490 = vld [vmem:[%s11 + $0x4] sm:$0xf]
    %v1491 = vld [vmem:[%s11 + $0x8] sm:$0xf]
    %v1492 = vld [vmem:[%s11 + $0xc] sm:$0xf]
    %v1493 = vld [vmem:[%s11 + $0x10] sm:$0xf]
    %v1494 = vld [vmem:[%s11 + $0x14] sm:$0xf]
    %v1495 = vld [vmem:[%s11 + $0x18] sm:$0xf]
    %v1496 = vld [vmem:[%s11 + $0x1c] sm:$0xf]
    %v1497 = vld [vmem:[%s11 + $0x20] sm:$0xf]
    %v1498 = vld [vmem:[%s11 + $0x24] sm:$0xf]
    %v1499 = vld [vmem:[%s11 + $0x28] sm:$0xf]
    %v1500 = vld [vmem:[%s11 + $0x2c] sm:$0xf]
    %v1501 = vld [vmem:[%s11 + $0x30] sm:$0xf]
    %v1502 = vld [vmem:[%s11 + $0x34] sm:$0xf]
    %v1503 = vld [vmem:[%s11 + $0x38] sm:$0xf]
    %v1504 = vld [vmem:[%s11 + $0x3c] sm:$0xf]
    %v1505 = vld [vmem:[#allocation12] sm:$0x1]
    %v1507 = vperm.slane %v1505, 0
    %v1525 = vunpack.c.l.b16 %v1489
    %v1526 = vunpack.c.l.b16 %v1490
    %v1527 = vunpack.c.l.b16 %v1491
    %v1528 = vunpack.c.l.b16 %v1492
    %v1529 = vunpack.c.l.b16 %v1493
    %v1530 = vunpack.c.l.b16 %v1494
    %v1531 = vunpack.c.l.b16 %v1495
    %v1532 = vunpack.c.l.b16 %v1496
    %v1533 = vunpack.c.l.b16 %v1497
    %v1534 = vunpack.c.l.b16 %v1498
    %v1535 = vunpack.c.l.b16 %v1499
    %v1536 = vunpack.c.l.b16 %v1500
    %v1537 = vunpack.c.l.b16 %v1501
    %v1538 = vunpack.c.l.b16 %v1502
    %v1539 = vunpack.c.l.b16 %v1503
    %v1540 = vunpack.c.l.b16 %v1504
    %v1541 = vpack.c.b16 %v1526, %v1525
    %v1542 = vpack.c.b16 %v1528, %v1527
    %v1543 = vpack.c.b16 %v1530, %v1529
    %v1544 = vpack.c.b16 %v1532, %v1531
    %v1545 = vpack.c.b16 %v1534, %v1533
    %v1546 = vpack.c.b16 %v1536, %v1535
    %v1547 = vpack.c.b16 %v1538, %v1537
    %v1548 = vpack.c.b16 %v1540, %v1539
    %1557 = vmatpush.bf16.msra.mxu0 %v1548
    %1558 = vmatpush.bf16.msra.mxu0 %v1547
    %1559 = vmatpush.bf16.msra.mxu0 %v1546
    %1560 = vmatpush.bf16.msra.mxu0 %v1545
    %1561 = vmatpush.bf16.msra.mxu0 %v1544
    %1562 = vmatpush.bf16.msra.mxu0 %v1543
    %1563 = vmatpush.bf16.msra.mxu0 %v1542
    %1564 = vmatpush.bf16.msra.mxu0 %v1541
    %1565 = vmatmul.bf16.gmra.mxu0 %v1488
    %v1566 = vpop.f32.mrf.mxu0
    %v1567 = vadd.f32 %v1507, %v1566
    %v1568 = vpop.f32.mrf.mxu0
    %1569 = vdwg.mxu0
    %v1570 = vmax.f32 %v1567, 0.0
    %v1571 = vpack.c.bf16 %v1570, %v1570
    %v1572 = vld [vmem:[%s13] sm:$0xf]
    %v1573 = vld [vmem:[%s13 + $0x4] sm:$0xf]
    %v1574 = vld [vmem:[%s13 + $0x8] sm:$0xf]
    %v1575 = vld [vmem:[%s13 + $0xc] sm:$0xf]
    %v1576 = vld [vmem:[%s13 + $0x10] sm:$0xf]
    %v1577 = vld [vmem:[%s13 + $0x14] sm:$0xf]
    %v1578 = vld [vmem:[%s13 + $0x18] sm:$0xf]
    %v1579 = vld [vmem:[%s13 + $0x1c] sm:$0xf]
    %v1580 = vld [vmem:[%s13 + $0x20] sm:$0xf]
    %v1581 = vld [vmem:[%s13 + $0x24] sm:$0xf]
    %v1582 = vld [vmem:[%s13 + $0x28] sm:$0xf]
    %v1583 = vld [vmem:[%s13 + $0x2c] sm:$0xf]
    %v1584 = vld [vmem:[%s13 + $0x30] sm:$0xf]
    %v1585 = vld [vmem:[%s13 + $0x34] sm:$0xf]
    %v1586 = vld [vmem:[%s13 + $0x38] sm:$0xf]
    %v1587 = vld [vmem:[%s13 + $0x3c] sm:$0xf]
    %v1588 = vld [vmem:[#allocation13] sm:$0x1]
    %v1590 = vperm.slane %v1588, 0
    %v1608 = vunpack.c.l.b16 %v1572
    %v1609 = vunpack.c.l.b16 %v1573
    %v1610 = vunpack.c.l.b16 %v1574
    %v1611 = vunpack.c.l.b16 %v1575
    %v1612 = vunpack.c.l.b16 %v1576
    %v1613 = vunpack.c.l.b16 %v1577
    %v1614 = vunpack.c.l.b16 %v1578
    %v1615 = vunpack.c.l.b16 %v1579
    %v1616 = vunpack.c.l.b16 %v1580
    %v1617 = vunpack.c.l.b16 %v1581
    %v1618 = vunpack.c.l.b16 %v1582
    %v1619 = vunpack.c.l.b16 %v1583
    %v1620 = vunpack.c.l.b16 %v1584
    %v1621 = vunpack.c.l.b16 %v1585
    %v1622 = vunpack.c.l.b16 %v1586
    %v1623 = vunpack.c.l.b16 %v1587
    %v1624 = vpack.c.b16 %v1609, %v1608
    %v1625 = vpack.c.b16 %v1611, %v1610
    %v1626 = vpack.c.b16 %v1613, %v1612
    %v1627 = vpack.c.b16 %v1615, %v1614
    %v1628 = vpack.c.b16 %v1617, %v1616
    %v1629 = vpack.c.b16 %v1619, %v1618
    %v1630 = vpack.c.b16 %v1621, %v1620
    %v1631 = vpack.c.b16 %v1623, %v1622
    %1640 = vmatpush.bf16.msra.mxu0 %v1631
    %1641 = vmatpush.bf16.msra.mxu0 %v1630
    %1642 = vmatpush.bf16.msra.mxu0 %v1629
    %1643 = vmatpush.bf16.msra.mxu0 %v1628
    %1644 = vmatpush.bf16.msra.mxu0 %v1627
    %1645 = vmatpush.bf16.msra.mxu0 %v1626
    %1646 = vmatpush.bf16.msra.mxu0 %v1625
    %1647 = vmatpush.bf16.msra.mxu0 %v1624
    %1648 = vmatmul.bf16.gmra.mxu0 %v1571
    %v1649 = vpop.f32.mrf.mxu0
    %v1650 = vadd.f32 %v1590, %v1649
    %v1651 = vpop.f32.mrf.mxu0
    %1652 = vdwg.mxu0
    %1653 = vst [vmem:[%s15] sm:$0xff] %v1650
    // Predicated region
    $region94: #{lstm_gnn_forward.1} parent=1 // pred_check
      _
    $region95: #{lstm_gnn_forward.1} parent=1 // pred_check_branch
      %1655 = sbr.rel (0) target = $region97
    $region96: #{lstm_gnn_forward.1} parent=1 // pred_region
      _
    $region97: #{lstm_gnn_forward.1} parent=1 // pred_fallthru
      _
    // Predicated region
    $region98: #{lstm_gnn_forward.1} parent=1 // pred_check
      _
    $region99: #{lstm_gnn_forward.1} parent=1 // pred_check_branch
      %1657 = sbr.rel (0) target = $region101
    $region100: #{lstm_gnn_forward.1} parent=1 // pred_region
      _
    $region101: #{lstm_gnn_forward.1} parent=1 // pred_fallthru
      _
    %1658 = vsyncpa [#allocation3], 1
    %1659 = vsyncpa [#allocation5], 1
    %1660 = vsyncpa [#allocation8], 1
    %1661 = vsyncpa [#allocation11], 1
    %1662 = vsyncpa [#allocation14], 1

</llo_original>
